<compile_context>
chip_gen: v5e
topology: v5e:2x2
jax: 0.10.0
libtpu: 0.0.40
codegen_flags: <defaults>
</compile_context>

<pallas_src>
import math

import jax
import jax.numpy as jnp
from jax.experimental import pallas as pl
from jax.experimental.pallas import tpu as pltpu

NEG_SLOPE = 0.01               # torch.nn.LeakyReLU default
ACT_DTYPE = jnp.bfloat16       # inter-layer activation storage dtype


# ----------------------------------------------------------------------------
# small helpers
# ----------------------------------------------------------------------------
def _leaky(x):
    return jnp.where(x > 0, x, NEG_SLOPE * x)


def _rup(x, m):
    return (x + m - 1) // m * m


def _get_padding(kernel_size: int, dilation: int) -> int:
    assert kernel_size % 2 == 1
    return dilation * (kernel_size - 1) // 2


def _get_strided_padding(stride: int):
    return stride // 2, stride - stride // 2


def _vmem_budget():
    """Generation-aware VMEM limit / per-step working-set budget."""
    cap = 64 * 1024 * 1024                      # conservative (v7x per-TC)
    try:
        info = pltpu.get_tpu_info()
        cap = int(getattr(info, "vmem_capacity_bytes", cap))
    except Exception:
        pass
    limit = min(cap * 3 // 4, 100 * 1024 * 1024)
    budget = max(6 * 1024 * 1024, limit // 4)
    return limit, budget


_VMEM_LIMIT, _TILE_BUDGET = _vmem_budget()


def _cparams():
    return pltpu.CompilerParams(
        dimension_semantics=("parallel", "parallel"),
        vmem_limit_bytes=_VMEM_LIMIT)


def _choose_l_tile(L, bytes_per_col, reserve=0, forced=None):
    """Largest multiple-of-128 divisor of L whose working set fits the budget."""
    if forced is not None:
        assert L % forced == 0 and (forced == L or forced % 128 == 0)
        return forced
    if L <= 256:
        return L
    budget = max(_TILE_BUDGET - reserve, 2 * 1024 * 1024)
    cap = max(128, (budget // max(bytes_per_col, 1)) // 128 * 128)
    if L <= cap:
        return L
    t = cap
    while t >= 128:
        if L % t == 0:
            return t
        t -= 128
    t = (L // 128) * 128
    while t >= 128:
        if L % t == 0:
            return t
        t -= 128
    # TODO(synk): L has no 128-multiple divisor; a cdiv grid + masked last
    # tile would bound VMEM for awkward L.  Fall back to one full-L tile.
    return L


def _build_halo(x, nt, lt, p):
    """(N, nt, C, 2p) merged [left|right] conv halos (zeros at sequence ends)."""
    N, C, L = x.shape
    xpad = jnp.pad(x, ((0, 0), (0, 0), (p, p)))
    tiles = []
    for t in range(nt):
        left = xpad[:, :, t * lt:t * lt + p]
        right = xpad[:, :, t * lt + p + lt:t * lt + 2 * p + lt]
        tiles.append(jnp.concatenate([left, right], axis=-1))
    return jnp.stack(tiles, axis=1)


# ----------------------------------------------------------------------------
# fused residual block (all dilated units of one encoder block)
# ----------------------------------------------------------------------------
def _make_block_kernel(C, lt, dilations, fuse, AP):
    K = 7
    k = len(dilations)
    pads = [_get_padding(K, d) for d in dilations]
    P = sum(pads)
    suf = [0] * (k + 1)                      # suffix halo sums
    for i in range(k - 1, -1, -1):
        suf[i] = suf[i + 1] + pads[i]

    def kernel(x_ref, halo_ref, w1_ref, b1_ref, w2_ref, b2_ref, o_ref,
               act_ref, hpad_ref, mm_ref):
        li = pl.program_id(0)
        last = pl.num_programs(0) - 1

        # residual stream (f32) with halo columns on each side of the tile
        act_ref[:, AP:AP + lt] = x_ref[0].astype(jnp.float32)
        halo = halo_ref[0, 0].astype(jnp.float32)
        act_ref[:, AP - P:AP] = halo[:, :P]
        act_ref[:, AP + lt:AP + lt + P] = halo[:, P:]

        for i in range(k):
            d, p = dilations[i], pads[i]
            off_in, win = AP - suf[i], lt + 2 * suf[i]
            off_out, wout = AP - suf[i + 1], lt + 2 * suf[i + 1]

            xin = act_ref[:, off_in:off_in + win]
            hpad_ref[:, :win] = _leaky(xin).astype(hpad_ref.dtype)

            if fuse:
                # in-VMEM im2col -> single (C, 7C)x(7C, wout) MXU matmul
                for t in range(K):
                    mm_ref[t * C:(t + 1) * C, :wout] = \
                        hpad_ref[:, t * d:t * d + wout]
                y1 = jnp.dot(w1_ref[i], mm_ref[:, :wout],
                             preferred_element_type=jnp.float32)
            else:
                # 7 taps accumulated in-place into one f32 scratch (MRB-friendly)
                mm_ref[:, :wout] = jnp.dot(
                    w1_ref[i, 0], hpad_ref[:, 0:wout],
                    preferred_element_type=jnp.float32)
                for t in range(1, K):
                    mm_ref[:, :wout] += jnp.dot(
                        w1_ref[i, t], hpad_ref[:, t * d:t * d + wout],
                        preferred_element_type=jnp.float32)
                y1 = mm_ref[:, :wout]

            h2 = _leaky(y1 + b1_ref[i])
            y2 = jnp.dot(w2_ref[i], h2.astype(jnp.bfloat16),
                         preferred_element_type=jnp.float32) + b2_ref[i]
            # residual add reuses the already-loaded input slice
            act_ref[:, off_out:off_out + wout] = xin[:, p:p + wout] + y2

            # re-establish the conv zero-padding at the true sequence ends so
            # the next fused unit sees zeros there (only first / last L-tile)
            if i < k - 1:
                @pl.when(li == 0)
                def _():
                    act_ref[:, AP - P:AP] = jnp.zeros((C, P), jnp.float32)

                @pl.when(li == last)
                def _():
                    act_ref[:, AP + lt:AP + lt + P] = \
                        jnp.zeros((C, P), jnp.float32)

        o_ref[0] = act_ref[:, AP:AP + lt].astype(o_ref.dtype)

    return kernel


def fused_residual_block(x, W1, B1, W2, B2, *, dilations, l_tile=None):
    """k fused units of: h = h + Conv1x1(LReLU(Conv_k7_dil(LReLU(h)))).

    x: (N, C, L).  W1: (k, C, 7C) bf16 (im2col) or (k, 7, C, C) bf16.
    B1/B2: (k, C, 1) f32.  W2: (k, C, C) bf16.
    """
    N, C, L = x.shape
    k = len(dilations)
    K = 7
    fuse = (W1.ndim == 3)
    pads = [_get_padding(K, d) for d in dilations]
    P = sum(pads)
    AP = _rup(max(P, 1), 128)

    w_bytes = int(W1.size + W2.size) * 2 + int(B1.size + B2.size) * 4
    per_col = C * (44 if fuse else 34)       # incl. f32 intermediates
    lt = _choose_l_tile(L, per_col, reserve=w_bytes, forced=l_tile)
    nt = L // lt

    halo = _build_halo(x, nt, lt, P)

    wout_max = lt + 2 * (P - pads[0])
    scratch = [pltpu.VMEM((C, 2 * AP + lt), jnp.float32),           # residual
               pltpu.VMEM((C, _rup(lt + 2 * P, 128)), jnp.bfloat16)]  # lrelu'd
    if fuse:
        scratch.append(pltpu.VMEM((K * C, _rup(wout_max, 128)), jnp.bfloat16))
        w1_spec = pl.BlockSpec((k, C, K * C), lambda l, n: (0, 0, 0))
    else:
        scratch.append(pltpu.VMEM((C, _rup(wout_max, 128)), jnp.float32))
        w1_spec = pl.BlockSpec((k, K, C, C), lambda l, n: (0, 0, 0, 0))

    kernel = _make_block_kernel(C, lt, tuple(dilations), fuse, AP)
    return pl.pallas_call(
        kernel,
        out_shape=jax.ShapeDtypeStruct((N, C, L), x.dtype),
        grid_spec=pltpu.PrefetchScalarGridSpec(
            num_scalar_prefetch=0,
            grid=(nt, N),
            in_specs=[
                pl.BlockSpec((1, C, lt), lambda l, n: (n, 0, l)),
                pl.BlockSpec((1, 1, C, 2 * P), lambda l, n: (n, l, 0, 0)),
                w1_spec,
                pl.BlockSpec((k, C, 1), lambda l, n: (0, 0, 0)),
                pl.BlockSpec((k, C, C), lambda l, n: (0, 0, 0)),
                pl.BlockSpec((k, C, 1), lambda l, n: (0, 0, 0)),
            ],
            out_specs=pl.BlockSpec((1, C, lt), lambda l, n: (n, 0, l)),
            scratch_shapes=scratch,
        ),
        compiler_params=_cparams(),
    )(x, halo, W1, B1, W2, B2)


# ----------------------------------------------------------------------------
# single 'same'-padded conv (input / output convolutions)
# ----------------------------------------------------------------------------
def _make_conv_kernel(C_in, lt, K, dilation, pre_act, fuse, AP):
    p = _get_padding(K, dilation)

    def kernel(x_ref, halo_ref, w_ref, b_ref, o_ref, hpad_ref, mm_ref):
        x = x_ref[0].astype(jnp.float32)
        halo = halo_ref[0, 0].astype(jnp.float32)
        if pre_act:
            x = _leaky(x)
            halo = _leaky(halo)
        hpad_ref[:, AP - p:AP] = halo[:, :p].astype(hpad_ref.dtype)
        hpad_ref[:, AP:AP + lt] = x.astype(hpad_ref.dtype)
        hpad_ref[:, AP + lt:AP + lt + p] = halo[:, p:].astype(hpad_ref.dtype)
        if fuse:
            for t in range(K):
                off = AP - p + t * dilation
                mm_ref[t * C_in:(t + 1) * C_in, :] = hpad_ref[:, off:off + lt]
            y = jnp.dot(w_ref[...], mm_ref[...],
                        preferred_element_type=jnp.float32)
        else:
            mm_ref[...] = jnp.dot(w_ref[0], hpad_ref[:, AP - p:AP - p + lt],
                                  preferred_element_type=jnp.float32)
            for t in range(1, K):
                off = AP - p + t * dilation
                mm_ref[...] += jnp.dot(w_ref[t], hpad_ref[:, off:off + lt],
                                       preferred_element_type=jnp.float32)
            y = mm_ref[...]
        o_ref[0] = (y + b_ref[...]).astype(o_ref.dtype)

    return kernel


def samepad_conv1d(x, w, b, *, K, dilation=1, pre_act=False,
                   out_dtype=None, l_tile=None):
    """'same'-padded stride-1 Conv1d with optional preceding LeakyReLU.

    `w` is prepared: (C_out, K*C_in) bf16 [im2col] or (K, C_out, C_in) bf16;
    `b` is (C_out, 1) f32.
    """
    fuse = (w.ndim == 2)
    if fuse:
        C_out, C_in = w.shape[0], w.shape[1] // K
    else:
        C_out, C_in = w.shape[1], w.shape[2]
    N, cx, L = x.shape
    if cx < C_in:
        x = jnp.pad(x, ((0, 0), (0, C_in - cx), (0, 0)))
    p = _get_padding(K, dilation)
    AP = _rup(max(p, 1), 128)
    out_dtype = out_dtype or x.dtype

    per_col = (4 * C_in + 4 * C_out + 2 * C_in
               + (2 * K * C_in if fuse else 4 * C_out) + 8 * (C_in + C_out))
    lt = _choose_l_tile(L, per_col, forced=l_tile)
    nt = L // lt

    halo = _build_halo(x, nt, lt, p)

    scratch = [pltpu.VMEM((C_in, AP + lt + 128), jnp.bfloat16)]
    if fuse:
        scratch.append(pltpu.VMEM((K * C_in, lt), jnp.bfloat16))
        w_spec = pl.BlockSpec((C_out, K * C_in), lambda l, n: (0, 0))
    else:
        scratch.append(pltpu.VMEM((C_out, lt), jnp.float32))
        w_spec = pl.BlockSpec((K, C_out, C_in), lambda l, n: (0, 0, 0))

    kernel = _make_conv_kernel(C_in, lt, K, dilation, pre_act, fuse, AP)
    return pl.pallas_call(
        kernel,
        out_shape=jax.ShapeDtypeStruct((N, C_out, L), out_dtype),
        grid_spec=pltpu.PrefetchScalarGridSpec(
            num_scalar_prefetch=0,
            grid=(nt, N),
            in_specs=[
                pl.BlockSpec((1, C_in, lt), lambda l, n: (n, 0, l)),
                pl.BlockSpec((1, 1, C_in, 2 * p), lambda l, n: (n, l, 0, 0)),
                w_spec,
                pl.BlockSpec((C_out, 1), lambda l, n: (0, 0)),
            ],
            out_specs=pl.BlockSpec((1, C_out, lt), lambda l, n: (n, 0, l)),
            scratch_shapes=scratch,
        ),
        compiler_params=_cparams(),
    )(x, halo, w, b)


# ----------------------------------------------------------------------------
# strided downsampling conv (LeakyReLU -> ZeroPad -> Conv1d(C, 2C, 2s, s))
# ----------------------------------------------------------------------------
def _make_down_kernel(lt, pre_act):
    def kernel(u_ref, uh_ref, w0_ref, w1_ref, b_ref, o_ref, sc_ref):
        a0 = u_ref[0]
        ah = uh_ref[0, 0]
        if pre_act:
            a0 = _leaky(a0)
            ah = _leaky(ah)
        sc_ref[:, :lt] = a0.astype(sc_ref.dtype)
        sc_ref[:, lt:lt + 1] = ah.astype(sc_ref.dtype)
        y = jnp.dot(w0_ref[...], a0.astype(jnp.bfloat16),
                    preferred_element_type=jnp.float32)
        y = y + jnp.dot(w1_ref[...], sc_ref[:, 1:lt + 1],
                        preferred_element_type=jnp.float32)
        o_ref[0] = (y + b_ref[...]).astype(o_ref.dtype)

    return kernel


def strided_downsample(x, w0, w1, b, *, stride, pre_act=True,
                       out_dtype=None, l_tile=None):
    """x: (N, C, L) -> (N, 2C, L//stride); phase-decomposed matmul kernel."""
    N, C, L = x.shape
    s = stride
    C_out = w0.shape[0]
    R = C * s
    fl, _ = _get_strided_padding(s)
    L_out = (L - s) // s + 1
    out_dtype = out_dtype or x.dtype

    # phase view u[c*s+r, q] = xpad[c, q*s+r]   (bf16, built once in XLA)
    need = (L_out + 1) * s
    pad_r = max(0, need - L - fl)
    xp = jnp.pad(x, ((0, 0), (0, 0), (fl, pad_r)))[:, :, :need]
    u_full = xp.reshape(N, C, L_out + 1, s).transpose(0, 1, 3, 2)
    u_full = u_full.reshape(N, R, L_out + 1).astype(jnp.bfloat16)

    per_col = 4 * R + 4 * C_out + 2 * R + 8 * C_out
    lt = _choose_l_tile(L_out, per_col, forced=l_tile)
    nt = L_out // lt

    u = u_full[:, :, :L_out]
    uh = u_full[:, :, lt::lt]                       # (N, R, nt): +1 shift halo
    uh = jnp.transpose(uh, (0, 2, 1))[..., None]    # (N, nt, R, 1)

    kernel = _make_down_kernel(lt, pre_act)
    return pl.pallas_call(
        kernel,
        out_shape=jax.ShapeDtypeStruct((N, C_out, L_out), out_dtype),
        grid_spec=pltpu.PrefetchScalarGridSpec(
            num_scalar_prefetch=0,
            grid=(nt, N),
            in_specs=[
                pl.BlockSpec((1, R, lt), lambda l, n: (n, 0, l)),
                pl.BlockSpec((1, 1, R, 1), lambda l, n: (n, l, 0, 0)),
                pl.BlockSpec((C_out, R), lambda l, n: (0, 0)),
                pl.BlockSpec((C_out, R), lambda l, n: (0, 0)),
                pl.BlockSpec((C_out, 1), lambda l, n: (0, 0)),
            ],
            out_specs=pl.BlockSpec((1, C_out, lt), lambda l, n: (n, 0, l)),
            scratch_shapes=[pltpu.VMEM((R, _rup(lt + 1, 128)), jnp.bfloat16)],
        ),
        compiler_params=_cparams(),
    )(u, uh, w0, w1, b)


# ----------------------------------------------------------------------------
# parameter preparation (one-time weight transpose / cast), init, forward
# ----------------------------------------------------------------------------
def _prep_conv_w(w, fuse):
    C_out, C_in, K = w.shape
    if fuse:
        return jnp.transpose(w, (0, 2, 1)).reshape(C_out, K * C_in).astype(
            jnp.bfloat16)
    return jnp.transpose(w, (2, 0, 1)).astype(jnp.bfloat16)


def _single_conv_prep(w, b):
    C_out, C_in, K = w.shape
    if C_in < 128:
        cin_p, fuse = max(16, _rup(C_in, 16)), True
    else:
        cin_p, fuse = _rup(C_in, 8), False
    if cin_p != C_in:
        w = jnp.pad(w, ((0, 0), (0, cin_p - C_in), (0, 0)))
    return _prep_conv_w(w, fuse), b.reshape(-1, 1).astype(jnp.float32)


def prepare_params(params, dilations, strides):
    """Pre-transpose / pre-cast all weights once (bf16 matmul operands)."""
    fp = {}
    fp["in_w"], fp["in_b"] = _single_conv_prep(params["in_w"], params["in_b"])
    blocks = []
    for bp, dil, s in zip(params["blocks"], dilations, strides):
        C = bp["units"][0]["w1"].shape[0]
        fuse = (C % 16 == 0) and (C < 128)
        W1 = jnp.stack([_prep_conv_w(u["w1"], fuse) for u in bp["units"]])
        B1 = jnp.stack([u["b1"].reshape(-1, 1) for u in bp["units"]]
                       ).astype(jnp.float32)
        W2 = jnp.stack([u["w2"].reshape(C, C) for u in bp["units"]]
                       ).astype(jnp.bfloat16)
        B2 = jnp.stack([u["b2"].reshape(-1, 1) for u in bp["units"]]
                       ).astype(jnp.float32)
        dw = bp["down_w"]                                    # (2C, C, 2s)
        dw0 = dw[:, :, :s].reshape(2 * C, C * s).astype(jnp.bfloat16)
        dw1 = dw[:, :, s:].reshape(2 * C, C * s).astype(jnp.bfloat16)
        db = bp["down_b"].reshape(-1, 1).astype(jnp.float32)
        blocks.append(dict(W1=W1, B1=B1, W2=W2, B2=B2,
                           dw0=dw0, dw1=dw1, db=db))
    fp["blocks"] = blocks
    fp["out_w"], fp["out_b"] = _single_conv_prep(params["out_w"],
                                                 params["out_b"])
    return fp


def encoder_forward(x, fparams, *, dilations, strides, latent_size,
                    act_dtype=ACT_DTYPE):
    h = samepad_conv1d(x.astype(act_dtype), fparams["in_w"], fparams["in_b"],
                       K=7, dilation=1, pre_act=False, out_dtype=act_dtype)
    for bp, dil, s in zip(fparams["blocks"], dilations, strides):
        h = fused_residual_block(h, bp["W1"], bp["B1"], bp["W2"], bp["B2"],
                                 dilations=dil)
        h = strided_downsample(h, bp["dw0"], bp["dw1"], bp["db"], stride=s,
                               pre_act=True, out_dtype=act_dtype)
    enc = samepad_conv1d(h, fparams["out_w"], fparams["out_b"], K=3,
                         dilation=1, pre_act=True, out_dtype=jnp.float32)
    return enc[:, :latent_size, :], enc[:, latent_size:, :]


def init_encoder_params(key, start_channels, dilations, strides, latent_size):
    def conv(key, c_out, c_in, k):
        kw, kb = jax.random.split(key)
        scale = 1.0 / math.sqrt(c_in * k)
        return (scale * jax.random.normal(kw, (c_out, c_in, k), jnp.float32),
                0.1 * scale * jax.random.normal(kb, (c_out,), jnp.float32))

    n_units = sum(len(d) for d in dilations)
    keys = iter(jax.random.split(key, 2 + len(strides) + 2 * n_units))
    params = {}
    params["in_w"], params["in_b"] = conv(next(keys), start_channels, 2, 7)
    blocks = []
    c = start_channels
    for dil, s in zip(dilations, strides):
        units = []
        for _ in dil:
            w1, b1 = conv(next(keys), c, c, 7)
            w2, b2 = conv(next(keys), c, c, 1)
            units.append(dict(w1=w1, b1=b1, w2=w2, b2=b2))
        dw, db = conv(next(keys), 2 * c, c, 2 * s)
        blocks.append(dict(units=units, down_w=dw, down_b=db))
        c *= 2
    params["blocks"] = blocks
    params["out_w"], params["out_b"] = conv(next(keys), 2 * latent_size, c, 3)
    return params


# ----------------------------------------------------------------------------
# pure-JAX reference of the PyTorch module (f32)
# ----------------------------------------------------------------------------
def ref_samepad_conv(x, w, b, dilation=1):
    K = w.shape[-1]
    p = _get_padding(K, dilation)
    y = jax.lax.conv_general_dilated(
        x, w, window_strides=(1,), padding=[(p, p)], rhs_dilation=(dilation,),
        dimension_numbers=("NCH", "OIH", "NCH"))
    return y + b[None, :, None]


def ref_strided_conv(x, w, b, stride):
    p_left, p_right = _get_strided_padding(stride)
    y = jax.lax.conv_general_dilated(
        x, w, window_strides=(stride,), padding=[(p_left, p_right)],
        dimension_numbers=("NCH", "OIH", "NCH"))
    return y + b[None, :, None]


def ref_residual_unit(x, w1, b1, w2, b2, dilation):
    h = _leaky(x)
    y1 = ref_samepad_conv(h, w1, b1, dilation)
    y2 = ref_samepad_conv(_leaky(y1), w2, b2, 1)
    return x + y2


def ref_encoder(x, params, dilations, strides, latent_size):
    h = ref_samepad_conv(x, params["in_w"], params["in_b"], 1)
    for bp, dil, s in zip(params["blocks"], dilations, strides):
        for u, d in zip(bp["units"], dil):
            h = ref_residual_unit(h, u["w1"], u["b1"], u["w2"], u["b2"], d)
        h = ref_strided_conv(_leaky(h), bp["down_w"], bp["down_b"], s)
    enc = ref_samepad_conv(_leaky(h), params["out_w"], params["out_b"], 1)
    return enc[:, :latent_size, :], enc[:, latent_size:, :]


# ----------------------------------------------------------------------------
# self-test
# ----------------------------------------------------------------------------
if __name__ == "__main__":
    key = jax.random.PRNGKey(0)
    k_unit, k_x, k_p = jax.random.split(key, 3)

    # --- check 1: fused residual block (im2col path), forced 4-way L tiling ---
    C, Lt, dils = 16, 512, [1, 3]
    ks = jax.random.split(k_unit, 9)
    xt = jax.random.normal(ks[0], (2, C, Lt), jnp.float32)
    raw_units = []
    for i in range(len(dils)):
        w1 = (1.0 / math.sqrt(7 * C)) * jax.random.normal(
            ks[1 + 4 * i], (C, C, 7), jnp.float32)
        b1 = 0.05 * jax.random.normal(ks[2 + 4 * i], (C,), jnp.float32)
        w2 = (1.0 / math.sqrt(C)) * jax.random.normal(
            ks[3 + 4 * i], (C, C, 1), jnp.float32)
        b2 = 0.05 * jax.random.normal(ks[4 + 4 * i], (C,), jnp.float32)
        raw_units.append((w1, b1, w2, b2))
    W1 = jnp.stack([_prep_conv_w(w1, True) for (w1, _, _, _) in raw_units])
    B1 = jnp.stack([b1.reshape(-1, 1) for (_, b1, _, _) in raw_units]
                   ).astype(jnp.float32)
    W2 = jnp.stack([w2.reshape(C, C) for (_, _, w2, _) in raw_units]
                   ).astype(jnp.bfloat16)
    B2 = jnp.stack([b2.reshape(-1, 1) for (_, _, _, b2) in raw_units]
                   ).astype(jnp.float32)

    out_blk = jax.block_until_ready(
        fused_residual_block(xt, W1, B1, W2, B2, dilations=dils, l_tile=128))
    ref_blk = xt
    for (w1, b1, w2, b2), d in zip(raw_units, dils):
        ref_blk = ref_residual_unit(ref_blk, w1, b1, w2, b2, d)
    assert out_blk.shape == ref_blk.shape
    err = float(jnp.max(jnp.abs(out_blk - ref_blk)))
    scale = float(jnp.max(jnp.abs(ref_blk)))
    assert err <= 0.04 * (1.0 + scale), f"fused block max abs err = {err}"

    # --- check 2: full Encoder forward (bf16 activation carry) ---
    start_channels = 8
    dilations = [[1, 3], [1, 3]]
    strides = [2, 2]
    latent_size = 8
    N, L = 2, 256
    x = jax.random.normal(k_x, (N, 2, L), jnp.float32)
    params = init_encoder_params(k_p, start_channels, dilations, strides,
                                 latent_size)
    fparams = prepare_params(params, dilations, strides)

    enc_fn = jax.jit(lambda xx, pp: encoder_forward(
        xx, pp, dilations=dilations, strides=strides, latent_size=latent_size))
    mean, logvar = jax.block_until_ready(enc_fn(x, fparams))

    r_mean, r_logvar = ref_encoder(x, params, dilations, strides, latent_size)
    L_out = L // (strides[0] * strides[1])
    assert mean.shape == (N, latent_size, L_out), mean.shape
    assert logvar.shape == (N, latent_size, L_out), logvar.shape
    e1 = float(jnp.max(jnp.abs(mean - r_mean)))
    e2 = float(jnp.max(jnp.abs(logvar - r_logvar)))
    s1 = float(jnp.max(jnp.abs(r_mean)))
    s2 = float(jnp.max(jnp.abs(r_logvar)))
    # bf16 matmul operands + bf16 activation carry is an intentional precision
    # trade-off; tolerance is scaled to the reference magnitude.
    assert e1 <= 0.06 * (1.0 + s1), f"mean err = {e1} (scale {s1})"
    assert e2 <= 0.06 * (1.0 + s2), f"logvar err = {e2} (scale {s2})"

    print("KERNEL_OK")
</pallas_src>

<mosaic_0001>
module attributes {stable_mosaic.version = 11 : i64} {
  func.func @kernel(%arg0: i32, %arg1: i32, %arg2: memref<1x16x128xf32, #tpu.memory_space<vmem>>, %arg3: memref<1x1x16x24xf32, #tpu.memory_space<vmem>>, %arg4: memref<2x16x112xbf16, #tpu.memory_space<vmem>>, %arg5: memref<2x16x1xf32, #tpu.memory_space<vmem>>, %arg6: memref<2x16x16xbf16, #tpu.memory_space<vmem>>, %arg7: memref<2x16x1xf32, #tpu.memory_space<vmem>>, %arg8: memref<1x16x128xf32, #tpu.memory_space<vmem>>, %arg9: memref<16x384xf32, #tpu.memory_space<vmem>>, %arg10: memref<16x256xbf16, #tpu.memory_space<vmem>>, %arg11: memref<112x256xbf16, #tpu.memory_space<vmem>>) attributes {dimension_semantics = [#tpu.dimension_semantics<parallel>, #tpu.dimension_semantics<parallel>], iteration_bounds = array<i64: 4, 2>, scalar_prefetch = 0 : i64, scratch_operands = 3 : i64, tpu.core_type = #tpu.core_type<tc>, window_params = [{transform_indices = @transform_0, window_bounds = array<i64: 1, 16, 128>}, {transform_indices = @transform_1, window_bounds = array<i64: 1, 1, 16, 24>}, {pipeline_mode = #tpu.pipeline_mode<synchronous>, transform_indices = @transform_2, window_bounds = array<i64: 2, 16, 112>}, {pipeline_mode = #tpu.pipeline_mode<synchronous>, transform_indices = @transform_3, window_bounds = array<i64: 2, 16, 1>}, {pipeline_mode = #tpu.pipeline_mode<synchronous>, transform_indices = @transform_4, window_bounds = array<i64: 2, 16, 16>}, {pipeline_mode = #tpu.pipeline_mode<synchronous>, transform_indices = @transform_5, window_bounds = array<i64: 2, 16, 1>}, {transform_indices = @transform_6, window_bounds = array<i64: 1, 16, 128>}]} {
    %c0 = arith.constant 0 : index
    %c0_0 = arith.constant 0 : index
    %c0_1 = arith.constant 0 : index
    %0 = vector.load %arg2[%c0, %c0_0, %c0_1] : memref<1x16x128xf32, #tpu.memory_space<vmem>>, vector<1x16x128xf32>
    %1 = vector.shape_cast %0 : vector<1x16x128xf32> to vector<16x128xf32>
    %c0_2 = arith.constant 0 : index
    %c128 = arith.constant 128 : index
    %2 = vector.load %arg9[%c0_2, %c128] : memref<16x384xf32, #tpu.memory_space<vmem>>, vector<16x128xf32>
    tpu.vector_store %arg9[%c0_2, %c128], %1 {strides = array<i32>} : memref<16x384xf32, #tpu.memory_space<vmem>>, vector<16x128xf32>,
    %c0_3 = arith.constant 0 : index
    %c0_4 = arith.constant 0 : index
    %c0_5 = arith.constant 0 : index
    %c0_6 = arith.constant 0 : index
    %3 = vector.load %arg3[%c0_3, %c0_4, %c0_5, %c0_6] : memref<1x1x16x24xf32, #tpu.memory_space<vmem>>, vector<1x1x16x24xf32>
    %4 = vector.shape_cast %3 : vector<1x1x16x24xf32> to vector<16x24xf32>
    %5 = vector.extract_strided_slice %4 {offsets = [0, 0], sizes = [16, 12], strides = [1, 1]} : vector<16x24xf32> to vector<16x12xf32>
    %c0_7 = arith.constant 0 : index
    %c116 = arith.constant 116 : index
    %6 = vector.load %arg9[%c0_7, %c116] : memref<16x384xf32, #tpu.memory_space<vmem>>, vector<16x12xf32>
    tpu.vector_store %arg9[%c0_7, %c116], %5 {strides = array<i32>} : memref<16x384xf32, #tpu.memory_space<vmem>>, vector<16x12xf32>,
    %7 = vector.extract_strided_slice %4 {offsets = [0, 12], sizes = [16, 12], strides = [1, 1]} : vector<16x24xf32> to vector<16x12xf32>
    %c0_8 = arith.constant 0 : index
    %c256 = arith.constant 256 : index
    %8 = vector.load %arg9[%c0_8, %c256] : memref<16x384xf32, #tpu.memory_space<vmem>>, vector<16x12xf32>
    tpu.vector_store %arg9[%c0_8, %c256], %7 {strides = array<i32>} : memref<16x384xf32, #tpu.memory_space<vmem>>, vector<16x12xf32>,
    %c0_9 = arith.constant 0 : index
    %c116_10 = arith.constant 116 : index
    %9 = vector.load %arg9[%c0_9, %c116_10] : memref<16x384xf32, #tpu.memory_space<vmem>>, vector<16x152xf32>
    %cst = arith.constant 0.000000e+00 : f32
    %10 = vector.broadcast %cst : f32 to vector<16x152xf32>
    %11 = arith.cmpf ogt, %9, %10 : vector<16x152xf32>
    %cst_11 = arith.constant 0.00999999977 : f32
    %12 = vector.broadcast %cst_11 : f32 to vector<16x152xf32>
    %13 = arith.mulf %12, %9 : vector<16x152xf32>
    %14 = arith.select %11, %9, %13 : vector<16x152xi1>, vector<16x152xf32>
    %15 = arith.truncf %14 : vector<16x152xf32> to vector<16x152xbf16>
    %c0_12 = arith.constant 0 : index
    %c0_13 = arith.constant 0 : index
    %16 = vector.load %arg10[%c0_12, %c0_13] : memref<16x256xbf16, #tpu.memory_space<vmem>>, vector<16x152xbf16>
    tpu.vector_store %arg10[%c0_12, %c0_13], %15 {strides = array<i32>} : memref<16x256xbf16, #tpu.memory_space<vmem>>, vector<16x152xbf16>,
    %c0_14 = arith.constant 0 : index
    %c0_15 = arith.constant 0 : index
    %17 = vector.load %arg10[%c0_14, %c0_15] : memref<16x256xbf16, #tpu.memory_space<vmem>>, vector<16x146xbf16>
    %c0_16 = arith.constant 0 : index
    %c0_17 = arith.constant 0 : index
    %18 = vector.load %arg11[%c0_16, %c0_17] : memref<112x256xbf16, #tpu.memory_space<vmem>>, vector<16x146xbf16>
    tpu.vector_store %arg11[%c0_16, %c0_17], %17 {strides = array<i32>} : memref<112x256xbf16, #tpu.memory_space<vmem>>, vector<16x146xbf16>,
    %c0_18 = arith.constant 0 : index
    %c1 = arith.constant 1 : index
    %19 = vector.load %arg10[%c0_18, %c1] : memref<16x256xbf16, #tpu.memory_space<vmem>>, vector<16x146xbf16>
    %c16 = arith.constant 16 : index
    %c0_19 = arith.constant 0 : index
    %20 = vector.load %arg11[%c16, %c0_19] : memref<112x256xbf16, #tpu.memory_space<vmem>>, vector<16x146xbf16>
    tpu.vector_store %arg11[%c16, %c0_19], %19 {strides = array<i32>} : memref<112x256xbf16, #tpu.memory_space<vmem>>, vector<16x146xbf16>,
    %c0_20 = arith.constant 0 : index
    %c2 = arith.constant 2 : index
    %21 = vector.load %arg10[%c0_20, %c2] : memref<16x256xbf16, #tpu.memory_space<vmem>>, vector<16x146xbf16>
    %c32 = arith.constant 32 : index
    %c0_21 = arith.constant 0 : index
    %22 = vector.load %arg11[%c32, %c0_21] : memref<112x256xbf16, #tpu.memory_space<vmem>>, vector<16x146xbf16>
    tpu.vector_store %arg11[%c32, %c0_21], %21 {strides = array<i32>} : memref<112x256xbf16, #tpu.memory_space<vmem>>, vector<16x146xbf16>,
    %c0_22 = arith.constant 0 : index
    %c3 = arith.constant 3 : index
    %23 = vector.load %arg10[%c0_22, %c3] : memref<16x256xbf16, #tpu.memory_space<vmem>>, vector<16x146xbf16>
    %c48 = arith.constant 48 : index
    %c0_23 = arith.constant 0 : index
    %24 = vector.load %arg11[%c48, %c0_23] : memref<112x256xbf16, #tpu.memory_space<vmem>>, vector<16x146xbf16>
    tpu.vector_store %arg11[%c48, %c0_23], %23 {strides = array<i32>} : memref<112x256xbf16, #tpu.memory_space<vmem>>, vector<16x146xbf16>,
    %c0_24 = arith.constant 0 : index
    %c4 = arith.constant 4 : index
    %25 = vector.load %arg10[%c0_24, %c4] : memref<16x256xbf16, #tpu.memory_space<vmem>>, vector<16x146xbf16>
    %c64 = arith.constant 64 : index
    %c0_25 = arith.constant 0 : index
    %26 = vector.load %arg11[%c64, %c0_25] : memref<112x256xbf16, #tpu.memory_space<vmem>>, vector<16x146xbf16>
    tpu.vector_store %arg11[%c64, %c0_25], %25 {strides = array<i32>} : memref<112x256xbf16, #tpu.memory_space<vmem>>, vector<16x146xbf16>,
    %c0_26 = arith.constant 0 : index
    %c5 = arith.constant 5 : index
    %27 = vector.load %arg10[%c0_26, %c5] : memref<16x256xbf16, #tpu.memory_space<vmem>>, vector<16x146xbf16>
    %c80 = arith.constant 80 : index
    %c0_27 = arith.constant 0 : index
    %28 = vector.load %arg11[%c80, %c0_27] : memref<112x256xbf16, #tpu.memory_space<vmem>>, vector<16x146xbf16>
    tpu.vector_store %arg11[%c80, %c0_27], %27 {strides = array<i32>} : memref<112x256xbf16, #tpu.memory_space<vmem>>, vector<16x146xbf16>,
    %c0_28 = arith.constant 0 : index
    %c6 = arith.constant 6 : index
    %29 = vector.load %arg10[%c0_28, %c6] : memref<16x256xbf16, #tpu.memory_space<vmem>>, vector<16x146xbf16>
    %c96 = arith.constant 96 : index
    %c0_29 = arith.constant 0 : index
    %30 = vector.load %arg11[%c96, %c0_29] : memref<112x256xbf16, #tpu.memory_space<vmem>>, vector<16x146xbf16>
    tpu.vector_store %arg11[%c96, %c0_29], %29 {strides = array<i32>} : memref<112x256xbf16, #tpu.memory_space<vmem>>, vector<16x146xbf16>,
    %c0_30 = arith.constant 0 : index
    %c0_31 = arith.constant 0 : index
    %c0_32 = arith.constant 0 : index
    %31 = vector.load %arg4[%c0_30, %c0_31, %c0_32] : memref<2x16x112xbf16, #tpu.memory_space<vmem>>, vector<1x16x112xbf16>
    %32 = vector.shape_cast %31 : vector<1x16x112xbf16> to vector<16x112xbf16>
    %c0_33 = arith.constant 0 : index
    %c0_34 = arith.constant 0 : index
    %33 = vector.load %arg11[%c0_33, %c0_34] : memref<112x256xbf16, #tpu.memory_space<vmem>>, vector<112x146xbf16>
    %cst_35 = arith.constant dense<0.000000e+00> : vector<16x146xf32>
    %34 = tpu.matmul %32, %33, %cst_35 {dimension_numbers = #tpu.dot_dimension_numbers<[1], [0], [0], [1], [0, 0, 1, 1], [], []>} : vector<16x112xbf16>, vector<112x146xbf16>, vector<16x146xf32> -> vector<16x146xf32>
    %c0_36 = arith.constant 0 : index
    %c0_37 = arith.constant 0 : index
    %c0_38 = arith.constant 0 : index
    %35 = vector.load %arg5[%c0_36, %c0_37, %c0_38] : memref<2x16x1xf32, #tpu.memory_space<vmem>>, vector<1x16x1xf32>
    %36 = vector.shape_cast %35 : vector<1x16x1xf32> to vector<16x1xf32>
    %37 = vector.broadcast %36 : vector<16x1xf32> to vector<16x146xf32>
    %38 = arith.addf %34, %37 : vector<16x146xf32>
    %cst_39 = arith.constant 0.000000e+00 : f32
    %39 = vector.broadcast %cst_39 : f32 to vector<16x146xf32>
    %40 = arith.cmpf ogt, %38, %39 : vector<16x146xf32>
    %cst_40 = arith.constant 0.00999999977 : f32
    %41 = vector.broadcast %cst_40 : f32 to vector<16x146xf32>
    %42 = arith.mulf %41, %38 : vector<16x146xf32>
    %43 = arith.select %40, %38, %42 : vector<16x146xi1>, vector<16x146xf32>
    %c0_41 = arith.constant 0 : index
    %c0_42 = arith.constant 0 : index
    %c0_43 = arith.constant 0 : index
    %44 = vector.load %arg6[%c0_41, %c0_42, %c0_43] : memref<2x16x16xbf16, #tpu.memory_space<vmem>>, vector<1x16x16xbf16>
    %45 = vector.shape_cast %44 : vector<1x16x16xbf16> to vector<16x16xbf16>
    %46 = arith.truncf %43 : vector<16x146xf32> to vector<16x146xbf16>
    %cst_44 = arith.constant dense<0.000000e+00> : vector<16x146xf32>
    %47 = tpu.matmul %45, %46, %cst_44 {dimension_numbers = #tpu.dot_dimension_numbers<[1], [0], [0], [1], [0, 0, 1, 1], [], []>} : vector<16x16xbf16>, vector<16x146xbf16>, vector<16x146xf32> -> vector<16x146xf32>
    %c0_45 = arith.constant 0 : index
    %c0_46 = arith.constant 0 : index
    %c0_47 = arith.constant 0 : index
    %48 = vector.load %arg7[%c0_45, %c0_46, %c0_47] : memref<2x16x1xf32, #tpu.memory_space<vmem>>, vector<1x16x1xf32>
    %49 = vector.shape_cast %48 : vector<1x16x1xf32> to vector<16x1xf32>
    %50 = vector.broadcast %49 : vector<16x1xf32> to vector<16x146xf32>
    %51 = arith.addf %47, %50 : vector<16x146xf32>
    %52 = vector.extract_strided_slice %9 {offsets = [0, 3], sizes = [16, 146], strides = [1, 1]} : vector<16x152xf32> to vector<16x146xf32>
    %53 = arith.addf %52, %51 : vector<16x146xf32>
    %c0_48 = arith.constant 0 : index
    %c119 = arith.constant 119 : index
    %54 = vector.load %arg9[%c0_48, %c119] : memref<16x384xf32, #tpu.memory_space<vmem>>, vector<16x146xf32>
    tpu.vector_store %arg9[%c0_48, %c119], %53 {strides = array<i32>} : memref<16x384xf32, #tpu.memory_space<vmem>>, vector<16x146xf32>,
    %c0_i32 = arith.constant 0 : i32
    %55 = arith.cmpi eq, %arg0, %c0_i32 : i32
    %56 = arith.extui %55 : i1 to i32
    %c0_i32_49 = arith.constant 0 : i32
    %57 = arith.cmpi ne, %56, %c0_i32_49 : i32
    scf.if %57 {
      %cst_106 = arith.constant 0.000000e+00 : f32
      %111 = vector.broadcast %cst_106 : f32 to vector<16x12xf32>
      %c0_107 = arith.constant 0 : index
      %c116_108 = arith.constant 116 : index
      %112 = vector.load %arg9[%c0_107, %c116_108] : memref<16x384xf32, #tpu.memory_space<vmem>>, vector<16x12xf32>
      tpu.vector_store %arg9[%c0_107, %c116_108], %111 {strides = array<i32>} : memref<16x384xf32, #tpu.memory_space<vmem>>, vector<16x12xf32>,
    } else {
    }
    %c3_i32 = arith.constant 3 : i32
    %58 = arith.cmpi eq, %arg0, %c3_i32 : i32
    %59 = arith.extui %58 : i1 to i32
    %c0_i32_50 = arith.constant 0 : i32
    %60 = arith.cmpi ne, %59, %c0_i32_50 : i32
    scf.if %60 {
      %cst_106 = arith.constant 0.000000e+00 : f32
      %111 = vector.broadcast %cst_106 : f32 to vector<16x12xf32>
      %c0_107 = arith.constant 0 : index
      %c256_108 = arith.constant 256 : index
      %112 = vector.load %arg9[%c0_107, %c256_108] : memref<16x384xf32, #tpu.memory_space<vmem>>, vector<16x12xf32>
      tpu.vector_store %arg9[%c0_107, %c256_108], %111 {strides = array<i32>} : memref<16x384xf32, #tpu.memory_space<vmem>>, vector<16x12xf32>,
    } else {
    }
    %c0_51 = arith.constant 0 : index
    %c119_52 = arith.constant 119 : index
    %61 = vector.load %arg9[%c0_51, %c119_52] : memref<16x384xf32, #tpu.memory_space<vmem>>, vector<16x146xf32>
    %cst_53 = arith.constant 0.000000e+00 : f32
    %62 = vector.broadcast %cst_53 : f32 to vector<16x146xf32>
    %63 = arith.cmpf ogt, %61, %62 : vector<16x146xf32>
    %cst_54 = arith.constant 0.00999999977 : f32
    %64 = vector.broadcast %cst_54 : f32 to vector<16x146xf32>
    %65 = arith.mulf %64, %61 : vector<16x146xf32>
    %66 = arith.select %63, %61, %65 : vector<16x146xi1>, vector<16x146xf32>
    %67 = arith.truncf %66 : vector<16x146xf32> to vector<16x146xbf16>
    %c0_55 = arith.constant 0 : index
    %c0_56 = arith.constant 0 : index
    %68 = vector.load %arg10[%c0_55, %c0_56] : memref<16x256xbf16, #tpu.memory_space<vmem>>, vector<16x146xbf16>
    tpu.vector_store %arg10[%c0_55, %c0_56], %67 {strides = array<i32>} : memref<16x256xbf16, #tpu.memory_space<vmem>>, vector<16x146xbf16>,
    %c0_57 = arith.constant 0 : index
    %c0_58 = arith.constant 0 : index
    %69 = vector.load %arg10[%c0_57, %c0_58] : memref<16x256xbf16, #tpu.memory_space<vmem>>, vector<16x128xbf16>
    %c0_59 = arith.constant 0 : index
    %c0_60 = arith.constant 0 : index
    %70 = vector.load %arg11[%c0_59, %c0_60] : memref<112x256xbf16, #tpu.memory_space<vmem>>, vector<16x128xbf16>
    tpu.vector_store %arg11[%c0_59, %c0_60], %69 {strides = array<i32>} : memref<112x256xbf16, #tpu.memory_space<vmem>>, vector<16x128xbf16>,
    %c0_61 = arith.constant 0 : index
    %c3_62 = arith.constant 3 : index
    %71 = vector.load %arg10[%c0_61, %c3_62] : memref<16x256xbf16, #tpu.memory_space<vmem>>, vector<16x128xbf16>
    %c16_63 = arith.constant 16 : index
    %c0_64 = arith.constant 0 : index
    %72 = vector.load %arg11[%c16_63, %c0_64] : memref<112x256xbf16, #tpu.memory_space<vmem>>, vector<16x128xbf16>
    tpu.vector_store %arg11[%c16_63, %c0_64], %71 {strides = array<i32>} : memref<112x256xbf16, #tpu.memory_space<vmem>>, vector<16x128xbf16>,
    %c0_65 = arith.constant 0 : index
    %c6_66 = arith.constant 6 : index
    %73 = vector.load %arg10[%c0_65, %c6_66] : memref<16x256xbf16, #tpu.memory_space<vmem>>, vector<16x128xbf16>
    %c32_67 = arith.constant 32 : index
    %c0_68 = arith.constant 0 : index
    %74 = vector.load %arg11[%c32_67, %c0_68] : memref<112x256xbf16, #tpu.memory_space<vmem>>, vector<16x128xbf16>
    tpu.vector_store %arg11[%c32_67, %c0_68], %73 {strides = array<i32>} : memref<112x256xbf16, #tpu.memory_space<vmem>>, vector<16x128xbf16>,
    %c0_69 = arith.constant 0 : index
    %c9 = arith.constant 9 : index
    %75 = vector.load %arg10[%c0_69, %c9] : memref<16x256xbf16, #tpu.memory_space<vmem>>, vector<16x128xbf16>
    %c48_70 = arith.constant 48 : index
    %c0_71 = arith.constant 0 : index
    %76 = vector.load %arg11[%c48_70, %c0_71] : memref<112x256xbf16, #tpu.memory_space<vmem>>, vector<16x128xbf16>
    tpu.vector_store %arg11[%c48_70, %c0_71], %75 {strides = array<i32>} : memref<112x256xbf16, #tpu.memory_space<vmem>>, vector<16x128xbf16>,
    %c0_72 = arith.constant 0 : index
    %c12 = arith.constant 12 : index
    %77 = vector.load %arg10[%c0_72, %c12] : memref<16x256xbf16, #tpu.memory_space<vmem>>, vector<16x128xbf16>
    %c64_73 = arith.constant 64 : index
    %c0_74 = arith.constant 0 : index
    %78 = vector.load %arg11[%c64_73, %c0_74] : memref<112x256xbf16, #tpu.memory_space<vmem>>, vector<16x128xbf16>
    tpu.vector_store %arg11[%c64_73, %c0_74], %77 {strides = array<i32>} : memref<112x256xbf16, #tpu.memory_space<vmem>>, vector<16x128xbf16>,
    %c0_75 = arith.constant 0 : index
    %c15 = arith.constant 15 : index
    %79 = vector.load %arg10[%c0_75, %c15] : memref<16x256xbf16, #tpu.memory_space<vmem>>, vector<16x128xbf16>
    %c80_76 = arith.constant 80 : index
    %c0_77 = arith.constant 0 : index
    %80 = vector.load %arg11[%c80_76, %c0_77] : memref<112x256xbf16, #tpu.memory_space<vmem>>, vector<16x128xbf16>
    tpu.vector_store %arg11[%c80_76, %c0_77], %79 {strides = array<i32>} : memref<112x256xbf16, #tpu.memory_space<vmem>>, vector<16x128xbf16>,
    %c0_78 = arith.constant 0 : index
    %c18 = arith.constant 18 : index
    %81 = vector.load %arg10[%c0_78, %c18] : memref<16x256xbf16, #tpu.memory_space<vmem>>, vector<16x128xbf16>
    %c96_79 = arith.constant 96 : index
    %c0_80 = arith.constant 0 : index
    %82 = vector.load %arg11[%c96_79, %c0_80] : memref<112x256xbf16, #tpu.memory_space<vmem>>, vector<16x128xbf16>
    tpu.vector_store %arg11[%c96_79, %c0_80], %81 {strides = array<i32>} : memref<112x256xbf16, #tpu.memory_space<vmem>>, vector<16x128xbf16>,
    %c1_81 = arith.constant 1 : index
    %c0_82 = arith.constant 0 : index
    %c0_83 = arith.constant 0 : index
    %83 = vector.load %arg4[%c1_81, %c0_82, %c0_83] : memref<2x16x112xbf16, #tpu.memory_space<vmem>>, vector<1x16x112xbf16>
    %84 = vector.shape_cast %83 : vector<1x16x112xbf16> to vector<16x112xbf16>
    %c0_84 = arith.constant 0 : index
    %c0_85 = arith.constant 0 : index
    %85 = vector.load %arg11[%c0_84, %c0_85] : memref<112x256xbf16, #tpu.memory_space<vmem>>, vector<112x128xbf16>
    %cst_86 = arith.constant dense<0.000000e+00> : vector<16x128xf32>
    %86 = tpu.matmul %84, %85, %cst_86 {dimension_numbers = #tpu.dot_dimension_numbers<[1], [0], [0], [1], [0, 0, 1, 1], [], []>} : vector<16x112xbf16>, vector<112x128xbf16>, vector<16x128xf32> -> vector<16x128xf32>
    %c1_87 = arith.constant 1 : index
    %c0_88 = arith.constant 0 : index
    %c0_89 = arith.constant 0 : index
    %87 = vector.load %arg5[%c1_87, %c0_88, %c0_89] : memref<2x16x1xf32, #tpu.memory_space<vmem>>, vector<1x16x1xf32>
    %88 = vector.shape_cast %87 : vector<1x16x1xf32> to vector<16x1xf32>
    %89 = vector.broadcast %88 : vector<16x1xf32> to vector<16x128xf32>
    %90 = arith.addf %86, %89 : vector<16x128xf32>
    %cst_90 = arith.constant 0.000000e+00 : f32
    %91 = vector.broadcast %cst_90 : f32 to vector<16x128xf32>
    %92 = arith.cmpf ogt, %90, %91 : vector<16x128xf32>
    %cst_91 = arith.constant 0.00999999977 : f32
    %93 = vector.broadcast %cst_91 : f32 to vector<16x128xf32>
    %94 = arith.mulf %93, %90 : vector<16x128xf32>
    %95 = arith.select %92, %90, %94 : vector<16x128xi1>, vector<16x128xf32>
    %c1_92 = arith.constant 1 : index
    %c0_93 = arith.constant 0 : index
    %c0_94 = arith.constant 0 : index
    %96 = vector.load %arg6[%c1_92, %c0_93, %c0_94] : memref<2x16x16xbf16, #tpu.memory_space<vmem>>, vector<1x16x16xbf16>
    %97 = vector.shape_cast %96 : vector<1x16x16xbf16> to vector<16x16xbf16>
    %98 = arith.truncf %95 : vector<16x128xf32> to vector<16x128xbf16>
    %cst_95 = arith.constant dense<0.000000e+00> : vector<16x128xf32>
    %99 = tpu.matmul %97, %98, %cst_95 {dimension_numbers = #tpu.dot_dimension_numbers<[1], [0], [0], [1], [0, 0, 1, 1], [], []>} : vector<16x16xbf16>, vector<16x128xbf16>, vector<16x128xf32> -> vector<16x128xf32>
    %c1_96 = arith.constant 1 : index
    %c0_97 = arith.constant 0 : index
    %c0_98 = arith.constant 0 : index
    %100 = vector.load %arg7[%c1_96, %c0_97, %c0_98] : memref<2x16x1xf32, #tpu.memory_space<vmem>>, vector<1x16x1xf32>
    %101 = vector.shape_cast %100 : vector<1x16x1xf32> to vector<16x1xf32>
    %102 = vector.broadcast %101 : vector<16x1xf32> to vector<16x128xf32>
    %103 = arith.addf %99, %102 : vector<16x128xf32>
    %104 = vector.extract_strided_slice %61 {offsets = [0, 9], sizes = [16, 128], strides = [1, 1]} : vector<16x146xf32> to vector<16x128xf32>
    %105 = arith.addf %104, %103 : vector<16x128xf32>
    %c0_99 = arith.constant 0 : index
    %c128_100 = arith.constant 128 : index
    %106 = vector.load %arg9[%c0_99, %c128_100] : memref<16x384xf32, #tpu.memory_space<vmem>>, vector<16x128xf32>
    tpu.vector_store %arg9[%c0_99, %c128_100], %105 {strides = array<i32>} : memref<16x384xf32, #tpu.memory_space<vmem>>, vector<16x128xf32>,
    %c0_101 = arith.constant 0 : index
    %c128_102 = arith.constant 128 : index
    %107 = vector.load %arg9[%c0_101, %c128_102] : memref<16x384xf32, #tpu.memory_space<vmem>>, vector<16x128xf32>
    %c0_103 = arith.constant 0 : index
    %c0_104 = arith.constant 0 : index
    %c0_105 = arith.constant 0 : index
    %108 = vector.load %arg8[%c0_103, %c0_104, %c0_105] : memref<1x16x128xf32, #tpu.memory_space<vmem>>, vector<1x16x128xf32>
    %109 = vector.shape_cast %108 : vector<1x16x128xf32> to vector<16x128xf32>
    %110 = vector.shape_cast %107 : vector<16x128xf32> to vector<1x16x128xf32>
    tpu.vector_store %arg8[%c0_103, %c0_104, %c0_105], %110 {strides = array<i32>} : memref<1x16x128xf32, #tpu.memory_space<vmem>>, vector<1x16x128xf32>,
    return
  }
  func.func @transform_0(%arg0: i32, %arg1: i32) -> (i32, i32, i32) {
    %c0_i32 = arith.constant 0 : i32
    %c0_i32_0 = arith.constant 0 : i32
    return %arg1, %c0_i32, %arg0 : i32, i32, i32
  }
  func.func @transform_1(%arg0: i32, %arg1: i32) -> (i32, i32, i32, i32) {
    %c0_i32 = arith.constant 0 : i32
    %c0_i32_0 = arith.constant 0 : i32
    %c0_i32_1 = arith.constant 0 : i32
    return %arg1, %arg0, %c0_i32, %c0_i32_0 : i32, i32, i32, i32
  }
  func.func @transform_2(%arg0: i32, %arg1: i32) -> (i32, i32, i32) {
    %c0_i32 = arith.constant 0 : i32
    %c0_i32_0 = arith.constant 0 : i32
    %c0_i32_1 = arith.constant 0 : i32
    %c0_i32_2 = arith.constant 0 : i32
    return %c0_i32, %c0_i32_0, %c0_i32_1 : i32, i32, i32
  }
  func.func @transform_3(%arg0: i32, %arg1: i32) -> (i32, i32, i32) {
    %c0_i32 = arith.constant 0 : i32
    %c0_i32_0 = arith.constant 0 : i32
    %c0_i32_1 = arith.constant 0 : i32
    %c0_i32_2 = arith.constant 0 : i32
    return %c0_i32, %c0_i32_0, %c0_i32_1 : i32, i32, i32
  }
  func.func @transform_4(%arg0: i32, %arg1: i32) -> (i32, i32, i32) {
    %c0_i32 = arith.constant 0 : i32
    %c0_i32_0 = arith.constant 0 : i32
    %c0_i32_1 = arith.constant 0 : i32
    %c0_i32_2 = arith.constant 0 : i32
    return %c0_i32, %c0_i32_0, %c0_i32_1 : i32, i32, i32
  }
  func.func @transform_5(%arg0: i32, %arg1: i32) -> (i32, i32, i32) {
    %c0_i32 = arith.constant 0 : i32
    %c0_i32_0 = arith.constant 0 : i32
    %c0_i32_1 = arith.constant 0 : i32
    %c0_i32_2 = arith.constant 0 : i32
    return %c0_i32, %c0_i32_0, %c0_i32_1 : i32, i32, i32
  }
  func.func @transform_6(%arg0: i32, %arg1: i32) -> (i32, i32, i32) {
    %c0_i32 = arith.constant 0 : i32
    %c0_i32_0 = arith.constant 0 : i32
    return %arg1, %c0_i32, %arg0 : i32, i32, i32
  }
}

</mosaic_0001>

<llo_original>
// kernel: tpu_custom_call.1
$region0: #{tpu_custom_call.1}
  #allocation0 [shape = 'u32[]', space=smem, size = 0x4, offset = 0x4, fixed_abs, tag = 'smem constant byte address 0x4 - core index']
  #allocation1 [shape = 'u32[72,128]{1,0:T(1,128)}', space=vmem, size = 0x9000, scoped, tag = 'internal scratch']
  #allocation2 [shape = 'f32[16,384]{1,0:T(8,128)}', space=vmem, size = 0x6000, scoped, tag = 'scratch operand']
  #allocation3 [shape = 'bf16[16,256]{1,0:T(8,128)(2,1)}', space=vmem, size = 0x2000, scoped, tag = 'scratch operand']
  #allocation4 [shape = 'bf16[112,256]{1,0:T(8,128)(2,1)}', space=vmem, size = 0xe000, scoped, tag = 'scratch operand']
  %s0 = inlined_call_operand.hbm [shape: f32[2,16,512], index: 0, kind: input, shape index: {}]
  %s1 = inlined_call_operand.hbm [shape: f32[2,4,16,24], index: 1, kind: input, shape index: {}]
  %s2 = inlined_call_operand.vmem [shape: bf16[2,16,112], index: 2, kind: input, shape index: {}]
  %s3 = inlined_call_operand.vmem [shape: f32[2,16,1], index: 3, kind: input, shape index: {}]
  %s4 = inlined_call_operand.vmem [shape: bf16[2,16,16], index: 4, kind: input, shape index: {}]
  %s5 = inlined_call_operand.vmem [shape: f32[2,16,1], index: 5, kind: input, shape index: {}]
  %s6 = inlined_call_operand.hbm [shape: f32[2,16,512], index: 6, kind: output, shape index: {}]
  %s7 = sld [smem:[#allocation0]]
  $region73: #{tpu_custom_call.1} parent=0
    _
  %s9 = ssub.s32 1, %s7
  %s10 = scalar_select 0, %s9, %s7
  $region1: #{tpu_custom_call.1} parent=0
    #allocation5 [shape = 'u8[16384]{0}', space=vmem, size = 0x4000, scoped, tag = 'input window, operand 0']
    #allocation6 [shape = 's32[2]{0}', space=sflag, size = 0x8, scoped, tag = 'scoped memory for tpu_custom_call.1']
    #allocation7 [shape = 's32[2]{0}', space=sflag, size = 0x8, scoped, tag = 'scoped memory for tpu_custom_call.1']
    #allocation8 [shape = 'u8[16384]{0}', space=vmem, size = 0x4000, scoped, tag = 'input window, operand 1']
    #allocation9 [shape = 's32[2]{0}', space=sflag, size = 0x8, scoped, tag = 'scoped memory for tpu_custom_call.1']
    #allocation10 [shape = 'u8[16384]{0}', space=vmem, size = 0x4000, scoped, tag = 'output window, operand 0']
    %11 = vsyncpa [#allocation6], 0
    %s12 = scalar_lea.sflag [#allocation6], 1
    %13 = vsyncpa %s12, 0
    %14 = vsyncpa [#allocation9], 0
    %s15 = scalar_lea.sflag [#allocation9], 1
    %16 = vsyncpa %s15, 0
    %17 = vsyncpa [#allocation7], 0
    %s18 = scalar_lea.sflag [#allocation7], 1
    %19 = vsyncpa %s18, 0
    loop: start=0, step=1, limit=10
    $region2: #{tpu_custom_call.1} parent=1 // loop_pre_header
      _
    $region3: #{tpu_custom_call.1} parent=1 // loop_header
      %s21 = sphi 0, %s25
      %p22 = scmp.ge.s32.totalorder %s21, 10
      %s28 = sphi 0, %s40
      %s29 = sphi 0, %s36
      %s30 = sphi 0, %s28
      %s31 = sphi 0, %s29
      %s32 = sphi 0, %s30
      %s33 = sphi 0, %s31
      %s45 = sphi 0, %s47
      %s48 = sphi 0, %s45
      %s49 = sphi 0, %s48
      %s65 = sphi 0, %s49
      %s73 = sphi 0, %s75
      %s76 = sphi 0, %s73
      %s77 = sphi 0, %s76
      %s93 = sphi 0, %s77
      %s97 = sphi 0, %s97
      %s99 = sphi 0, %s97
      %s100 = sphi 0, %s99
      %s114 = sphi 0, %s100
      %s118 = sphi 0, %s118
      %s120 = sphi 0, %s118
      %s121 = sphi 0, %s120
      %s135 = sphi 0, %s121
      %s139 = sphi 0, %s139
      %s141 = sphi 0, %s139
      %s142 = sphi 0, %s141
      %s156 = sphi 0, %s142
      %s160 = sphi 0, %s160
      %s162 = sphi 0, %s160
      %s163 = sphi 0, %s162
      %s177 = sphi 0, %s163
      %s185 = sphi 0, %s187
      %s188 = sphi 0, %s185
      %s189 = sphi 0, %s188
      %s205 = sphi 0, %s189
    $region4: #{tpu_custom_call.1} parent=1 // loop_header_branch
      %24 = sbr.rel (%p22) target = $region8
    $region5: #{tpu_custom_call.1} parent=1 // loop_body
      %s26 = ssub.s32 %s21, 1
      %s27 = ssub.s32 %s21, 2
      %s34 = sadd.s32 1, %s29
      %p35 = scmp.ge.s32.totalorder %s34, 2
      %s36 = scalar_select %p35, 0, %s34
      %s37 = sadd.s32 1, %s28
      %s38 = scalar_select %p35, %s37, %s28
      %p39 = scmp.ge.s32.totalorder %s38, 4
      %s40 = scalar_select %p39, 0, %s38
      %s41 = ssub.s32 %s29, %s36
      %s42 = ssub.s32 %s28, %s40
      %s43 = sor.u32 %s41, %s42
      %p44 = scmp.eq.s32.totalorder %s43, 0
      %s46 = sadd.s32 %s45, 1
      %s47 = scalar_select %p44, %s45, %s46
      %p50 = pneg %p44
      %p51 = scmp.eq.s32.totalorder %s21, 7
      %p52 = por %p50, %p51
      %p53 = scmp.ne.s32.totalorder %s45, %s48
      %p54 = scmp.eq.s32.totalorder %s21, 0
      %p55 = por %p53, %p54
      %p56 = scmp.ne.s32.totalorder %s45, %s48
      %p57 = scmp.eq.s32.totalorder %s26, 7
      %p58 = por %p56, %p57
      %p59 = scmp.ne.s32.totalorder %s48, %s49
      %p60 = scmp.eq.s32.totalorder %s26, 0
      %p61 = por %p59, %p60
      %p62 = scmp.ne.s32.totalorder %s48, %s49
      %p63 = scmp.eq.s32.totalorder %s27, 7
      %p64 = por %p62, %p63
      %p66 = scmp.ne.s32.totalorder %s49, %s65
      %p67 = scmp.eq.s32.totalorder %s27, 0
      %p68 = por %p66, %p67
      %s69 = ssub.s32 %s29, %s36
      %s70 = ssub.s32 %s28, %s40
      %s71 = sor.u32 %s69, %s70
      %p72 = scmp.eq.s32.totalorder %s71, 0
      %s74 = sadd.s32 %s73, 1
      %s75 = scalar_select %p72, %s73, %s74
      %p78 = pneg %p72
      %p79 = scmp.eq.s32.totalorder %s21, 7
      %p80 = por %p78, %p79
      %p81 = scmp.ne.s32.totalorder %s73, %s76
      %p82 = scmp.eq.s32.totalorder %s21, 0
      %p83 = por %p81, %p82
      %p84 = scmp.ne.s32.totalorder %s73, %s76
      %p85 = scmp.eq.s32.totalorder %s26, 7
      %p86 = por %p84, %p85
      %p87 = scmp.ne.s32.totalorder %s76, %s77
      %p88 = scmp.eq.s32.totalorder %s26, 0
      %p89 = por %p87, %p88
      %p90 = scmp.ne.s32.totalorder %s76, %s77
      %p91 = scmp.eq.s32.totalorder %s27, 7
      %p92 = por %p90, %p91
      %p94 = scmp.ne.s32.totalorder %s77, %s93
      %p95 = scmp.eq.s32.totalorder %s27, 0
      %p96 = por %p94, %p95
      %s98 = sadd.s32 %s97, 1
      %p101 = scmp.eq.s32.totalorder %s21, 7
      %p102 = scmp.ne.s32.totalorder %s97, %s99
      %p103 = scmp.eq.s32.totalorder %s21, 0
      %p104 = por %p102, %p103
      %p105 = scmp.ne.s32.totalorder %s97, %s99
      %p106 = scmp.eq.s32.totalorder %s26, 7
      %p107 = por %p105, %p106
      %p108 = scmp.ne.s32.totalorder %s99, %s100
      %p109 = scmp.eq.s32.totalorder %s26, 0
      %p110 = por %p108, %p109
      %p111 = scmp.ne.s32.totalorder %s99, %s100
      %p112 = scmp.eq.s32.totalorder %s27, 7
      %p113 = por %p111, %p112
      %p115 = scmp.ne.s32.totalorder %s100, %s114
      %p116 = scmp.eq.s32.totalorder %s27, 0
      %p117 = por %p115, %p116
      %s119 = sadd.s32 %s118, 1
      %p122 = scmp.eq.s32.totalorder %s21, 7
      %p123 = scmp.ne.s32.totalorder %s118, %s120
      %p124 = scmp.eq.s32.totalorder %s21, 0
      %p125 = por %p123, %p124
      %p126 = scmp.ne.s32.totalorder %s118, %s120
      %p127 = scmp.eq.s32.totalorder %s26, 7
      %p128 = por %p126, %p127
      %p129 = scmp.ne.s32.totalorder %s120, %s121
      %p130 = scmp.eq.s32.totalorder %s26, 0
      %p131 = por %p129, %p130
      %p132 = scmp.ne.s32.totalorder %s120, %s121
      %p133 = scmp.eq.s32.totalorder %s27, 7
      %p134 = por %p132, %p133
      %p136 = scmp.ne.s32.totalorder %s121, %s135
      %p137 = scmp.eq.s32.totalorder %s27, 0
      %p138 = por %p136, %p137
      %s140 = sadd.s32 %s139, 1
      %p143 = scmp.eq.s32.totalorder %s21, 7
      %p144 = scmp.ne.s32.totalorder %s139, %s141
      %p145 = scmp.eq.s32.totalorder %s21, 0
      %p146 = por %p144, %p145
      %p147 = scmp.ne.s32.totalorder %s139, %s141
      %p148 = scmp.eq.s32.totalorder %s26, 7
      %p149 = por %p147, %p148
      %p150 = scmp.ne.s32.totalorder %s141, %s142
      %p151 = scmp.eq.s32.totalorder %s26, 0
      %p152 = por %p150, %p151
      %p153 = scmp.ne.s32.totalorder %s141, %s142
      %p154 = scmp.eq.s32.totalorder %s27, 7
      %p155 = por %p153, %p154
      %p157 = scmp.ne.s32.totalorder %s142, %s156
      %p158 = scmp.eq.s32.totalorder %s27, 0
      %p159 = por %p157, %p158
      %s161 = sadd.s32 %s160, 1
      %p164 = scmp.eq.s32.totalorder %s21, 7
      %p165 = scmp.ne.s32.totalorder %s160, %s162
      %p166 = scmp.eq.s32.totalorder %s21, 0
      %p167 = por %p165, %p166
      %p168 = scmp.ne.s32.totalorder %s160, %s162
      %p169 = scmp.eq.s32.totalorder %s26, 7
      %p170 = por %p168, %p169
      %p171 = scmp.ne.s32.totalorder %s162, %s163
      %p172 = scmp.eq.s32.totalorder %s26, 0
      %p173 = por %p171, %p172
      %p174 = scmp.ne.s32.totalorder %s162, %s163
      %p175 = scmp.eq.s32.totalorder %s27, 7
      %p176 = por %p174, %p175
      %p178 = scmp.ne.s32.totalorder %s163, %s177
      %p179 = scmp.eq.s32.totalorder %s27, 0
      %p180 = por %p178, %p179
      %s181 = ssub.s32 %s29, %s36
      %s182 = ssub.s32 %s28, %s40
      %s183 = sor.u32 %s181, %s182
      %p184 = scmp.eq.s32.totalorder %s183, 0
      %s186 = sadd.s32 %s185, 1
      %s187 = scalar_select %p184, %s185, %s186
      %p190 = pneg %p184
      %p191 = scmp.eq.s32.totalorder %s21, 7
      %p192 = por %p190, %p191
      %p193 = scmp.ne.s32.totalorder %s185, %s188
      %p194 = scmp.eq.s32.totalorder %s21, 0
      %p195 = por %p193, %p194
      %p196 = scmp.ne.s32.totalorder %s185, %s188
      %p197 = scmp.eq.s32.totalorder %s26, 7
      %p198 = por %p196, %p197
      %p199 = scmp.ne.s32.totalorder %s188, %s189
      %p200 = scmp.eq.s32.totalorder %s26, 0
      %p201 = por %p199, %p200
      %p202 = scmp.ne.s32.totalorder %s188, %s189
      %p203 = scmp.eq.s32.totalorder %s27, 7
      %p204 = por %p202, %p203
      %p206 = scmp.ne.s32.totalorder %s189, %s205
      %p207 = scmp.eq.s32.totalorder %s27, 0
      %p208 = por %p206, %p207
      %p209 = scmp.le.s32.totalorder 1, %s21
      %p210 = scmp.lt.s32.totalorder %s21, 9
      %p211 = pnand %p209, %p210
      %p212 = pneg %p211
      // Predicated region
      $region9: #{tpu_custom_call.1} parent=5 // pred_check
        _
      $region10: #{tpu_custom_call.1} parent=5 // pred_check_branch
        %214 = sbr.rel (%p211) target = $region12
      $region11: #{tpu_custom_call.1} parent=5 // pred_region
        %s215 = ssub.s32 %s21, 1
        // Predicated region
        $region13: #{tpu_custom_call.1} parent=11 // pred_check
          %p216 = pneg %p110
        $region14: #{tpu_custom_call.1} parent=11 // pred_check_branch
          %218 = sbr.rel (%p216) target = $region16
        $region15: #{tpu_custom_call.1} parent=11 // pred_region
          _
        $region16: #{tpu_custom_call.1} parent=11 // pred_fallthru
          _
        // Predicated region
        $region17: #{tpu_custom_call.1} parent=11 // pred_check
          %p219 = pneg %p131
        $region18: #{tpu_custom_call.1} parent=11 // pred_check_branch
          %221 = sbr.rel (%p219) target = $region20
        $region19: #{tpu_custom_call.1} parent=11 // pred_region
          _
        $region20: #{tpu_custom_call.1} parent=11 // pred_fallthru
          _
        // Predicated region
        $region21: #{tpu_custom_call.1} parent=11 // pred_check
          %p222 = pneg %p152
        $region22: #{tpu_custom_call.1} parent=11 // pred_check_branch
          %224 = sbr.rel (%p222) target = $region24
        $region23: #{tpu_custom_call.1} parent=11 // pred_region
          _
        $region24: #{tpu_custom_call.1} parent=11 // pred_fallthru
          _
        // Predicated region
        $region25: #{tpu_custom_call.1} parent=11 // pred_check
          %p225 = pneg %p173
        $region26: #{tpu_custom_call.1} parent=11 // pred_check_branch
          %227 = sbr.rel (%p225) target = $region28
        $region27: #{tpu_custom_call.1} parent=11 // pred_region
          _
        $region28: #{tpu_custom_call.1} parent=11 // pred_fallthru
          _
      $region12: #{tpu_custom_call.1} parent=5 // pred_fallthru
        _
      %p228 = scmp.lt.s32.totalorder %s21, 8
      // Predicated region
      $region29: #{tpu_custom_call.1} parent=5 // pred_check
        %p229 = pneg %p228
      $region30: #{tpu_custom_call.1} parent=5 // pred_check_branch
        %231 = sbr.rel (%p229) target = $region32
      $region31: #{tpu_custom_call.1} parent=5 // pred_region
        // Predicated region
        $region33: #{tpu_custom_call.1} parent=31 // pred_check
          %p232 = pneg %p55
        $region34: #{tpu_custom_call.1} parent=31 // pred_check_branch
          %234 = sbr.rel (%p232) target = $region36
        $region35: #{tpu_custom_call.1} parent=31 // pred_region
          %s235 = sand.u32 %s45, 1
          %s236 = scalar_lea.sflag [#allocation6], %s235
          %s237 = sand.u32 %s45, 1
          %s238 = smul.addr %s237, 16
          %s239 = scalar_lea.vmem [#allocation5], %s238
          %241 = vsyncadd %s236, 0
          %s242 = smul.addr %s29, 8
          %s243 = sadd.s32 %s28, %s242
          %s244 = smul.addr %s243, 8
          %s245 = scalar_lea.hbm %s0, %s244
          %s246 = sshll.u32 %s245, 4
          %s247 = int_to_ptr.hbm [resolvable:$true] %s246
          %s248 = sshll.u32 %s239, 4
          %s249 = int_to_ptr.vmem [resolvable:$true] %s248
          %254 = dma.hbm_to_vmem [thread:$0]  %s247, 256, %s249, %s236, 512, 128, 8
        $region36: #{tpu_custom_call.1} parent=31 // pred_fallthru
          _
        // Predicated region
        $region37: #{tpu_custom_call.1} parent=31 // pred_check
          %p255 = pneg %p83
        $region38: #{tpu_custom_call.1} parent=31 // pred_check_branch
          %257 = sbr.rel (%p255) target = $region40
        $region39: #{tpu_custom_call.1} parent=31 // pred_region
          %s258 = sand.u32 %s73, 1
          %s259 = scalar_lea.sflag [#allocation9], %s258
          %s260 = sand.u32 %s73, 1
          %s261 = smul.addr %s260, 16
          %s262 = scalar_lea.vmem [#allocation8], %s261
          %264 = vsyncadd %s259, 0
          %s265 = smul.addr %s28, 2
          %s266 = smul.addr %s29, 8
          %s267 = sadd.s32 %s265, %s266
          %s268 = smul.addr %s267, 8
          %s269 = scalar_lea.hbm %s1, %s268
          %s270 = sshll.u32 %s269, 4
          %s271 = int_to_ptr.hbm [resolvable:$true] %s270
          %s272 = sshll.u32 %s262, 4
          %s273 = int_to_ptr.vmem [resolvable:$true] %s272
          %278 = dma.hbm_to_vmem [thread:$0]  %s271, 256, %s273, %s259, 128, 128, 8
        $region40: #{tpu_custom_call.1} parent=31 // pred_fallthru
          _
      $region32: #{tpu_custom_call.1} parent=5 // pred_fallthru
        _
      %p279 = scmp.le.s32.totalorder 1, %s21
      %p280 = scmp.lt.s32.totalorder %s21, 9
      %p281 = pnand %p279, %p280
      %p282 = pneg %p281
      // Predicated region
      $region41: #{tpu_custom_call.1} parent=5 // pred_check
        _
      $region42: #{tpu_custom_call.1} parent=5 // pred_check_branch
        %284 = sbr.rel (%p281) target = $region44
      $region43: #{tpu_custom_call.1} parent=5 // pred_region
        %s285 = ssub.s32 %s21, 1
        %s286 = sand.u32 %s48, 1
        %s287 = scalar_lea.sflag [#allocation6], %s286
        %s288 = sand.u32 %s48, 1
        %s289 = smul.addr %s288, 16
        %s290 = scalar_lea.vmem [#allocation5], %s289
        // Predicated region
        $region45: #{tpu_custom_call.1} parent=43 // pred_check
          %p291 = pneg %p61
        $region46: #{tpu_custom_call.1} parent=43 // pred_check_branch
          %293 = sbr.rel (%p291) target = $region48
        $region47: #{tpu_custom_call.1} parent=43 // pred_region
          %295 = dma.done %s287, 256
        $region48: #{tpu_custom_call.1} parent=43 // pred_fallthru
          _
        %s296 = sand.u32 %s76, 1
        %s297 = scalar_lea.sflag [#allocation9], %s296
        %s298 = sand.u32 %s76, 1
        %s299 = smul.addr %s298, 16
        %s300 = scalar_lea.vmem [#allocation8], %s299
        // Predicated region
        $region49: #{tpu_custom_call.1} parent=43 // pred_check
          %p301 = pneg %p89
        $region50: #{tpu_custom_call.1} parent=43 // pred_check_branch
          %303 = sbr.rel (%p301) target = $region52
        $region51: #{tpu_custom_call.1} parent=43 // pred_region
          %305 = dma.done %s297, 256
        $region52: #{tpu_custom_call.1} parent=43 // pred_fallthru
          _
        %s306 = sand.u32 %s48, 1
        %s307 = scalar_lea.sflag [#allocation6], %s306
        %s308 = sand.u32 %s48, 1
        %s309 = smul.addr %s308, 16
        %s310 = scalar_lea.vmem [#allocation5], %s309
        %p311 = pneg %p61
        %p312 = pneg %p58
        %s313 = sand.u32 %s76, 1
        %s314 = scalar_lea.sflag [#allocation9], %s313
        %s315 = sand.u32 %s76, 1
        %s316 = smul.addr %s315, 16
        %s317 = scalar_lea.vmem [#allocation8], %s316
        %p318 = pneg %p89
        %p319 = pneg %p86
        %p320 = pneg %p110
        %p321 = pneg %p107
        %p322 = pneg %p131
        %p323 = pneg %p128
        %p324 = pneg %p152
        %p325 = pneg %p149
        %p326 = pneg %p173
        %p327 = pneg %p170
        %p328 = pneg %p201
        %p329 = pneg %p198
        %s330 = sand.u32 %s188, 1
        %s331 = scalar_lea.sflag [#allocation7], %s330
        %s332 = sand.u32 %s188, 1
        %s333 = smul.addr %s332, 16
        %s334 = scalar_lea.vmem [#allocation10], %s333
        %v336 = vld [vmem:[%s290] sm:$0xff]
        %v337 = vld [vmem:[%s290 + $0x8] sm:$0xff]
        %338 = vst [vmem:[#allocation2 + $0x8] sm:$0xff] %v336
        %339 = vst [vmem:[#allocation2 + $0x20] sm:$0xff] %v337
        %v340 = vld [vmem:[%s300] sm:$0xff]
        %v341 = vld [vmem:[%s300 + $0x8] sm:$0xff]
        %344 = vrot.lane.b32.xlu0 %v340, 116
        %v345 = vpop.permute.xlu0 %344
        %346 = vrot.lane.b32.xlu0 %v341, 116
        %v347 = vpop.permute.xlu0 %346
        %vm350 = vcmask 1048480
        %351 = vst.msk [vmem:[#allocation2] sm:$0xff] %vm350, %v345
        %352 = vst.msk [vmem:[#allocation2 + $0x18] sm:$0xff] %vm350, %v347
        %vm353 = vcmask 97280
        %354 = vst.msk [vmem:[#allocation2 + $0x10] sm:$0xff] %vm353, %v345
        %355 = vst.msk [vmem:[#allocation2 + $0x28] sm:$0xff] %vm353, %v347
        %v356 = vld [vmem:[#allocation2] sm:$0xff]
        %v357 = vld [vmem:[#allocation2 + $0x8] sm:$0xff]
        %v358 = vld [vmem:[#allocation2 + $0x10] sm:$0xff]
        %v359 = vld [vmem:[#allocation2 + $0x18] sm:$0xff]
        %v360 = vld [vmem:[#allocation2 + $0x20] sm:$0xff]
        %v361 = vld [vmem:[#allocation2 + $0x28] sm:$0xff]
        %vm362 = vcmp.gt.f32.partialorder %v356, 0.0
        %vm363 = vcmp.gt.f32.partialorder %v357, 0.0
        %vm364 = vcmp.gt.f32.partialorder %v358, 0.0
        %vm365 = vcmp.gt.f32.partialorder %v359, 0.0
        %vm366 = vcmp.gt.f32.partialorder %v360, 0.0
        %vm367 = vcmp.gt.f32.partialorder %v361, 0.0
        %v368 = vmul.f32 %v356, 0.01
        %v369 = vmul.f32 %v357, 0.01
        %v370 = vmul.f32 %v358, 0.01
        %v371 = vmul.f32 %v359, 0.01
        %v372 = vmul.f32 %v360, 0.01
        %v373 = vmul.f32 %v361, 0.01
        %v374 = vsel %vm362, %v356, %v368
        %v375 = vsel %vm363, %v357, %v369
        %v376 = vsel %vm364, %v358, %v370
        %v377 = vsel %vm365, %v359, %v371
        %v378 = vsel %vm366, %v360, %v372
        %v379 = vsel %vm367, %v361, %v373
        %v380 = vpack.c.bf16 %v375, %v374
        %v381 = vpack.c.bf16 %v376, %v376
        %v382 = vpack.c.bf16 %v378, %v377
        %v383 = vpack.c.bf16 %v379, %v379
        %388 = vrot.lane.b32.xlu0 %v380, 12
        %v389 = vpop.permute.xlu0 %388
        %390 = vrot.lane.b32.xlu0 %v381, 12
        %v391 = vpop.permute.xlu0 %390
        %392 = vrot.lane.b32.xlu0 %v382, 12
        %v393 = vpop.permute.xlu0 %392
        %394 = vrot.lane.b32.xlu0 %v383, 12
        %v395 = vpop.permute.xlu0 %394
        %v396 = vrot.slane %v389, 4
        %v397 = vrot.slane %v391, 4
        %v398 = vrot.slane %v393, 4
        %v399 = vrot.slane %v395, 4
        %vm400 = vcmask 1043456
        %v401 = vsel %vm400, %v396, %v397
        %vm402 = vcmask 97280
        %v403 = vsel %vm402, %v389, %v401
        %v404 = vsel %vm400, %v398, %v399
        %v405 = vsel %vm402, %v393, %v404
        %vm408 = vcmask 1043456
        %vm409 = vcmask 195588
        %vm410 = vmor %vm409, %vm408
        %411 = vst.msk [vmem:[#allocation3] sm:$0xff] %vm410, %v403
        %412 = vst.msk [vmem:[#allocation3 + $0x8] sm:$0xff] %vm410, %v405
        %v413 = vld [vmem:[#allocation3] sm:$0xff]
        %v414 = vld [vmem:[#allocation3 + $0x8] sm:$0xff]
        %vm415 = vcmask 146436
        %vm416 = vmor %vm415, %vm408
        %417 = vst.msk [vmem:[#allocation4] sm:$0xff] %vm416, %v413
        %418 = vst.msk [vmem:[#allocation4 + $0x8] sm:$0xff] %vm416, %v414
        %v419 = vld [vmem:[#allocation3] sm:$0xff]
        %v420 = vld [vmem:[#allocation3 + $0x8] sm:$0xff]
        %423 = vrot.lane.b32.xlu0 %v419, 127
        %v424 = vpop.permute.xlu0 %423
        %425 = vrot.lane.b32.xlu0 %v420, 127
        %v426 = vpop.permute.xlu0 %425
        %v427 = vrot.slane %v424, 4
        %v428 = vrot.slane %v426, 4
        %vm429 = vcmask 1039360
        %v430 = vsel %vm429, %v424, %v427
        %v431 = vsel %vm429, %v426, %v428
        %434 = vst.msk [vmem:[#allocation4 + $0x10] sm:$0xff] %vm416, %v430
        %435 = vst.msk [vmem:[#allocation4 + $0x18] sm:$0xff] %vm416, %v431
        %v436 = vld [vmem:[#allocation3] sm:$0xff]
        %v437 = vld [vmem:[#allocation3 + $0x8] sm:$0xff]
        %440 = vrot.lane.b32.xlu0 %v436, 126
        %v441 = vpop.permute.xlu0 %440
        %442 = vrot.lane.b32.xlu0 %v437, 126
        %v443 = vpop.permute.xlu0 %442
        %v444 = vrot.slane %v441, 4
        %v445 = vrot.slane %v443, 4
        %vm446 = vcmask 1031168
        %v447 = vsel %vm446, %v441, %v444
        %v448 = vsel %vm446, %v443, %v445
        %451 = vst.msk [vmem:[#allocation4 + $0x20] sm:$0xff] %vm416, %v447
        %452 = vst.msk [vmem:[#allocation4 + $0x28] sm:$0xff] %vm416, %v448
        %v453 = vld [vmem:[#allocation3] sm:$0xff]
        %v454 = vld [vmem:[#allocation3 + $0x8] sm:$0xff]
        %457 = vrot.lane.b32.xlu0 %v453, 125
        %v458 = vpop.permute.xlu0 %457
        %459 = vrot.lane.b32.xlu0 %v454, 125
        %v460 = vpop.permute.xlu0 %459
        %v461 = vrot.slane %v458, 4
        %v462 = vrot.slane %v460, 4
        %vm463 = vcmask 1022976
        %v464 = vsel %vm463, %v458, %v461
        %v465 = vsel %vm463, %v460, %v462
        %468 = vst.msk [vmem:[#allocation4 + $0x30] sm:$0xff] %vm416, %v464
        %469 = vst.msk [vmem:[#allocation4 + $0x38] sm:$0xff] %vm416, %v465
        %v470 = vld [vmem:[#allocation3] sm:$0xff]
        %v471 = vld [vmem:[#allocation3 + $0x8] sm:$0xff]
        %474 = vrot.lane.b32.xlu0 %v470, 124
        %v475 = vpop.permute.xlu0 %474
        %476 = vrot.lane.b32.xlu0 %v471, 124
        %v477 = vpop.permute.xlu0 %476
        %v478 = vrot.slane %v475, 4
        %v479 = vrot.slane %v477, 4
        %vm480 = vcmask 1014784
        %v481 = vsel %vm480, %v475, %v478
        %v482 = vsel %vm480, %v477, %v479
        %485 = vst.msk [vmem:[#allocation4 + $0x40] sm:$0xff] %vm416, %v481
        %486 = vst.msk [vmem:[#allocation4 + $0x48] sm:$0xff] %vm416, %v482
        %v487 = vld [vmem:[#allocation3] sm:$0xff]
        %v488 = vld [vmem:[#allocation3 + $0x8] sm:$0xff]
        %491 = vrot.lane.b32.xlu0 %v487, 123
        %v492 = vpop.permute.xlu0 %491
        %493 = vrot.lane.b32.xlu0 %v488, 123
        %v494 = vpop.permute.xlu0 %493
        %v495 = vrot.slane %v492, 4
        %v496 = vrot.slane %v494, 4
        %vm497 = vcmask 1006592
        %v498 = vsel %vm497, %v492, %v495
        %v499 = vsel %vm497, %v494, %v496
        %502 = vst.msk [vmem:[#allocation4 + $0x50] sm:$0xff] %vm416, %v498
        %503 = vst.msk [vmem:[#allocation4 + $0x58] sm:$0xff] %vm416, %v499
        %v504 = vld [vmem:[#allocation3] sm:$0xff]
        %v505 = vld [vmem:[#allocation3 + $0x8] sm:$0xff]
        %508 = vrot.lane.b32.xlu0 %v504, 122
        %v509 = vpop.permute.xlu0 %508
        %510 = vrot.lane.b32.xlu0 %v505, 122
        %v511 = vpop.permute.xlu0 %510
        %v512 = vrot.slane %v509, 4
        %v513 = vrot.slane %v511, 4
        %vm514 = vcmask 998400
        %v515 = vsel %vm514, %v509, %v512
        %v516 = vsel %vm514, %v511, %v513
        %519 = vst.msk [vmem:[#allocation4 + $0x60] sm:$0xff] %vm416, %v515
        %520 = vst.msk [vmem:[#allocation4 + $0x68] sm:$0xff] %vm416, %v516
        %v521 = vld [vmem:[%s2] sm:$0xf]
        %v522 = vld [vmem:[%s2 + $0x4] sm:$0xf]
        %v523 = vld [vmem:[#allocation4] sm:$0xff]
        %v524 = vld [vmem:[#allocation4 + $0x8] sm:$0xff]
        %v525 = vld [vmem:[#allocation4 + $0x10] sm:$0xff]
        %v526 = vld [vmem:[#allocation4 + $0x18] sm:$0xff]
        %v527 = vld [vmem:[#allocation4 + $0x20] sm:$0xff]
        %v528 = vld [vmem:[#allocation4 + $0x28] sm:$0xff]
        %v529 = vld [vmem:[#allocation4 + $0x30] sm:$0xff]
        %v530 = vld [vmem:[#allocation4 + $0x38] sm:$0xff]
        %v531 = vld [vmem:[#allocation4 + $0x40] sm:$0xff]
        %v532 = vld [vmem:[#allocation4 + $0x48] sm:$0xff]
        %v533 = vld [vmem:[#allocation4 + $0x50] sm:$0xff]
        %v534 = vld [vmem:[#allocation4 + $0x58] sm:$0xff]
        %v535 = vld [vmem:[#allocation4 + $0x60] sm:$0xff]
        %v536 = vld [vmem:[#allocation4 + $0x68] sm:$0xff]
        %v537 = vld [vmem:[%s3] sm:$0xff]
        %v538 = vld [vmem:[%s3 + $0x8] sm:$0xff]
        %540 = vset.pattern.permute.xlu0 0
        %541 = vperm.xlu0 %540, %v537
        %v542 = vpop.permute.xlu0 %541
        %545 = vset.pattern.permute.xlu0 0
        %546 = vperm.xlu0 %545, %v538
        %v547 = vpop.permute.xlu0 %546
        %v551 = vunpack.c.l.b16 %v521
        %v552 = vunpack.c.l.b16 %v522
        %v553 = vpack.c.b16 %v552, %v551
        %v568 = vunpack.c.l.b16 %v523
        %v569 = vunpack.c.h.b16 %v523
        %v570 = vunpack.c.l.b16 %v524
        %v571 = vunpack.c.h.b16 %v524
        %v572 = vunpack.c.l.b16 %v525
        %v573 = vunpack.c.h.b16 %v525
        %v574 = vunpack.c.l.b16 %v526
        %v575 = vunpack.c.h.b16 %v526
        %v576 = vunpack.c.l.b16 %v527
        %v577 = vunpack.c.h.b16 %v527
        %v578 = vunpack.c.l.b16 %v528
        %v579 = vunpack.c.h.b16 %v528
        %v580 = vunpack.c.l.b16 %v529
        %v581 = vunpack.c.h.b16 %v529
        %v582 = vunpack.c.l.b16 %v530
        %v583 = vunpack.c.h.b16 %v530
        %v584 = vunpack.c.l.b16 %v531
        %v585 = vunpack.c.h.b16 %v531
        %v586 = vunpack.c.l.b16 %v532
        %v587 = vunpack.c.h.b16 %v532
        %v588 = vunpack.c.l.b16 %v533
        %v589 = vunpack.c.h.b16 %v533
        %v590 = vunpack.c.l.b16 %v534
        %v591 = vunpack.c.h.b16 %v534
        %v592 = vunpack.c.l.b16 %v535
        %v593 = vunpack.c.h.b16 %v535
        %v594 = vunpack.c.l.b16 %v536
        %v595 = vunpack.c.h.b16 %v536
        %v596 = vpack.c.b16 %v570, %v568
        %v597 = vpack.c.b16 %v571, %v569
        %v598 = vpack.c.b16 %v574, %v572
        %v599 = vpack.c.b16 %v575, %v573
        %v600 = vpack.c.b16 %v578, %v576
        %v601 = vpack.c.b16 %v579, %v577
        %v602 = vpack.c.b16 %v582, %v580
        %v603 = vpack.c.b16 %v583, %v581
        %v604 = vpack.c.b16 %v586, %v584
        %v605 = vpack.c.b16 %v587, %v585
        %v606 = vpack.c.b16 %v590, %v588
        %v607 = vpack.c.b16 %v591, %v589
        %v608 = vpack.c.b16 %v594, %v592
        %v609 = vpack.c.b16 %v595, %v593
        %vm624 = vcmask 916480
        %v626 = vsel %vm624, %v553, 0
        %628 = vmatpush.bf16.msra.mxu0 0
        %629 = vmatpush.bf16.msra.mxu0 %v608
        %630 = vmatpush.bf16.msra.mxu0 %v606
        %631 = vmatpush.bf16.msra.mxu0 %v604
        %632 = vmatpush.bf16.msra.mxu0 %v602
        %633 = vmatpush.bf16.msra.mxu0 %v600
        %634 = vmatpush.bf16.msra.mxu0 %v598
        %635 = vmatpush.bf16.msra.mxu0 %v596
        %636 = vmatmul.bf16.gmra.mxu0 %v626
        %v637 = vpop.f32.mrf.mxu0
        %v638 = vadd.f32 %v542, %v637
        %v639 = vpop.f32.mrf.mxu0
        %v640 = vadd.f32 %v547, %v639
        %641 = vdwg.mxu0
        %642 = vmatpush.bf16.msra.mxu0 0
        %643 = vmatpush.bf16.msra.mxu0 %v609
        %644 = vmatpush.bf16.msra.mxu0 %v607
        %645 = vmatpush.bf16.msra.mxu0 %v605
        %646 = vmatpush.bf16.msra.mxu0 %v603
        %647 = vmatpush.bf16.msra.mxu0 %v601
        %648 = vmatpush.bf16.msra.mxu0 %v599
        %649 = vmatpush.bf16.msra.mxu0 %v597
        %650 = vmatmul.bf16.gmra.mxu0 %v626
        %v651 = vpop.f32.mrf.mxu0
        %v652 = vadd.f32 %v542, %v651
        %v653 = vpop.f32.mrf.mxu0
        %v654 = vadd.f32 %v547, %v653
        %655 = vdwg.mxu0
        %vm656 = vcmp.gt.f32.partialorder %v638, 0.0
        %vm657 = vcmp.gt.f32.partialorder %v652, 0.0
        %vm658 = vcmp.gt.f32.partialorder %v640, 0.0
        %vm659 = vcmp.gt.f32.partialorder %v654, 0.0
        %v660 = vmul.f32 %v638, 0.01
        %v661 = vmul.f32 %v652, 0.01
        %v662 = vmul.f32 %v640, 0.01
        %v663 = vmul.f32 %v654, 0.01
        %v664 = vsel %vm656, %v638, %v660
        %v665 = vsel %vm657, %v652, %v661
        %v666 = vsel %vm658, %v640, %v662
        %v667 = vsel %vm659, %v654, %v663
        %v668 = vld [vmem:[%s4] sm:$0xf]
        %v669 = vld [vmem:[%s4 + $0x4] sm:$0xf]
        %v670 = vpack.c.bf16 %v666, %v664
        %v671 = vpack.c.bf16 %v667, %v665
        %v672 = vld [vmem:[%s5] sm:$0xff]
        %v673 = vld [vmem:[%s5 + $0x8] sm:$0xff]
        %675 = vset.pattern.permute.xlu0 0
        %676 = vperm.xlu0 %675, %v672
        %v677 = vpop.permute.xlu0 %676
        %680 = vset.pattern.permute.xlu0 0
        %681 = vperm.xlu0 %680, %v673
        %v682 = vpop.permute.xlu0 %681
        %v686 = vunpack.c.l.b16 %v668
        %v687 = vunpack.c.l.b16 %v669
        %v688 = vpack.c.b16 %v687, %v686
        %vm689 = vcmask 130048
        %v691 = vsel %vm689, %v688, 0
        %693 = vmatpush.bf16.msra.mxu0 0
        %694 = vmatpush.bf16.msra.mxu0 0
        %695 = vmatpush.bf16.msra.mxu0 0
        %696 = vmatpush.bf16.msra.mxu0 0
        %697 = vmatpush.bf16.msra.mxu0 0
        %698 = vmatpush.bf16.msra.mxu0 0
        %699 = vmatpush.bf16.msra.mxu0 0
        %700 = vmatpush.bf16.msra.mxu0 %v670
        %701 = vmatmul.bf16.gmra.mxu0 %v691
        %v702 = vpop.f32.mrf.mxu0
        %v703 = vadd.f32 %v677, %v702
        %v704 = vpop.f32.mrf.mxu0
        %v705 = vadd.f32 %v682, %v704
        %706 = vdwg.mxu0
        %707 = vmatpush.bf16.msra.mxu0 0
        %708 = vmatpush.bf16.msra.mxu0 0
        %709 = vmatpush.bf16.msra.mxu0 0
        %710 = vmatpush.bf16.msra.mxu0 0
        %711 = vmatpush.bf16.msra.mxu0 0
        %712 = vmatpush.bf16.msra.mxu0 0
        %713 = vmatpush.bf16.msra.mxu0 0
        %714 = vmatpush.bf16.msra.mxu0 %v671
        %715 = vmatmul.bf16.gmra.mxu0 %v691
        %v716 = vpop.f32.mrf.mxu0
        %v717 = vadd.f32 %v677, %v716
        %v718 = vpop.f32.mrf.mxu0
        %v719 = vadd.f32 %v682, %v718
        %720 = vdwg.mxu0
        %725 = vrot.lane.b32.xlu0 %v703, 119
        %v726 = vpop.permute.xlu0 %725
        %727 = vrot.lane.b32.xlu0 %v717, 119
        %v728 = vpop.permute.xlu0 %727
        %729 = vrot.lane.b32.xlu0 %v705, 119
        %v730 = vpop.permute.xlu0 %729
        %731 = vrot.lane.b32.xlu0 %v719, 119
        %v732 = vpop.permute.xlu0 %731
        %vm733 = vcmask 973824
        %v734 = vsel %vm733, %v726, %v728
        %v735 = vsel %vm733, %v730, %v732
        %v742 = vadd.f32 %v356, %v726
        %v743 = vadd.f32 %v357, %v734
        %v744 = vadd.f32 %v358, %v728
        %v745 = vadd.f32 %v359, %v730
        %v746 = vadd.f32 %v360, %v735
        %v747 = vadd.f32 %v361, %v732
        %vm748 = vcmask 1048504
        %749 = vst.msk [vmem:[#allocation2] sm:$0xff] %vm748, %v742
        %750 = vst [vmem:[#allocation2 + $0x8] sm:$0xff] %v743
        %vm751 = vcmask 72704
        %752 = vst.msk [vmem:[#allocation2 + $0x10] sm:$0xff] %vm751, %v744
        %753 = vst.msk [vmem:[#allocation2 + $0x18] sm:$0xff] %vm748, %v745
        %754 = vst [vmem:[#allocation2 + $0x20] sm:$0xff] %v746
        %755 = vst.msk [vmem:[#allocation2 + $0x28] sm:$0xff] %vm751, %v747
        %p756 = scmp.eq.s32.totalorder %s30, 0
        // Predicated region
        $region53: #{tpu_custom_call.1} parent=43 // pred_check
          %p757 = pneg %p756
        $region54: #{tpu_custom_call.1} parent=43 // pred_check_branch
          %759 = sbr.rel (%p757) target = $region56
        $region55: #{tpu_custom_call.1} parent=43 // pred_region
          %760 = vst.msk [vmem:[#allocation2] sm:$0xff] %vm350, 0.0
          %761 = vst.msk [vmem:[#allocation2 + $0x18] sm:$0xff] %vm350, 0.0
        $region56: #{tpu_custom_call.1} parent=43 // pred_fallthru
          _
        %p762 = scmp.eq.s32.totalorder %s30, 3
        // Predicated region
        $region57: #{tpu_custom_call.1} parent=43 // pred_check
          %p763 = pneg %p762
        $region58: #{tpu_custom_call.1} parent=43 // pred_check_branch
          %765 = sbr.rel (%p763) target = $region60
        $region59: #{tpu_custom_call.1} parent=43 // pred_region
          %766 = vst.msk [vmem:[#allocation2 + $0x10] sm:$0xff] %vm353, 0.0
          %767 = vst.msk [vmem:[#allocation2 + $0x28] sm:$0xff] %vm353, 0.0
        $region60: #{tpu_custom_call.1} parent=43 // pred_fallthru
          _
        %v768 = vld [vmem:[#allocation2] sm:$0xff]
        %v769 = vld [vmem:[#allocation2 + $0x8] sm:$0xff]
        %v770 = vld [vmem:[#allocation2 + $0x10] sm:$0xff]
        %v771 = vld [vmem:[#allocation2 + $0x18] sm:$0xff]
        %v772 = vld [vmem:[#allocation2 + $0x20] sm:$0xff]
        %v773 = vld [vmem:[#allocation2 + $0x28] sm:$0xff]
        %vm774 = vcmp.gt.f32.partialorder %v768, 0.0
        %vm775 = vcmp.gt.f32.partialorder %v769, 0.0
        %vm776 = vcmp.gt.f32.partialorder %v770, 0.0
        %vm777 = vcmp.gt.f32.partialorder %v771, 0.0
        %vm778 = vcmp.gt.f32.partialorder %v772, 0.0
        %vm779 = vcmp.gt.f32.partialorder %v773, 0.0
        %v780 = vmul.f32 %v768, 0.01
        %v781 = vmul.f32 %v769, 0.01
        %v782 = vmul.f32 %v770, 0.01
        %v783 = vmul.f32 %v771, 0.01
        %v784 = vmul.f32 %v772, 0.01
        %v785 = vmul.f32 %v773, 0.01
        %v786 = vsel %vm774, %v768, %v780
        %v787 = vsel %vm775, %v769, %v781
        %v788 = vsel %vm776, %v770, %v782
        %v789 = vsel %vm777, %v771, %v783
        %v790 = vsel %vm778, %v772, %v784
        %v791 = vsel %vm779, %v773, %v785
        %v792 = vpack.c.bf16 %v787, %v786
        %v793 = vpack.c.bf16 %v788, %v788
        %v794 = vpack.c.bf16 %v790, %v789
        %v795 = vpack.c.bf16 %v791, %v791
        %800 = vrot.lane.b32.xlu0 %v792, 9
        %v801 = vpop.permute.xlu0 %800
        %802 = vrot.lane.b32.xlu0 %v793, 9
        %v803 = vpop.permute.xlu0 %802
        %804 = vrot.lane.b32.xlu0 %v794, 9
        %v805 = vpop.permute.xlu0 %804
        %806 = vrot.lane.b32.xlu0 %v795, 9
        %v807 = vpop.permute.xlu0 %806
        %v808 = vrot.slane %v801, 4
        %v809 = vrot.slane %v803, 4
        %v810 = vrot.slane %v805, 4
        %v811 = vrot.slane %v807, 4
        %v812 = vsel %vm400, %v808, %v809
        %vm813 = vcmask 72704
        %v814 = vsel %vm813, %v801, %v812
        %v815 = vsel %vm400, %v810, %v811
        %v816 = vsel %vm813, %v805, %v815
        %819 = vst.msk [vmem:[#allocation3] sm:$0xff] %vm416, %v814
        %820 = vst.msk [vmem:[#allocation3 + $0x8] sm:$0xff] %vm416, %v816
        %v821 = vld [vmem:[#allocation3] sm:$0xf]
        %v822 = vld [vmem:[#allocation3 + $0x8] sm:$0xf]
        %823 = vst [vmem:[#allocation4] sm:$0xf] %v821
        %824 = vst [vmem:[#allocation4 + $0x8] sm:$0xf] %v822
        %v825 = vld [vmem:[#allocation3] sm:$0xff]
        %v826 = vld [vmem:[#allocation3 + $0x8] sm:$0xff]
        %829 = vrot.lane.b32.xlu0 %v825, 125
        %v830 = vpop.permute.xlu0 %829
        %831 = vrot.lane.b32.xlu0 %v826, 125
        %v832 = vpop.permute.xlu0 %831
        %v833 = vrot.slane %v830, 4
        %v834 = vrot.slane %v832, 4
        %v835 = vsel %vm463, %v830, %v833
        %v836 = vsel %vm463, %v832, %v834
        %839 = vst [vmem:[#allocation4 + $0x10] sm:$0xf] %v835
        %840 = vst [vmem:[#allocation4 + $0x18] sm:$0xf] %v836
        %v841 = vld [vmem:[#allocation3] sm:$0xff]
        %v842 = vld [vmem:[#allocation3 + $0x8] sm:$0xff]
        %845 = vrot.lane.b32.xlu0 %v841, 122
        %v846 = vpop.permute.xlu0 %845
        %847 = vrot.lane.b32.xlu0 %v842, 122
        %v848 = vpop.permute.xlu0 %847
        %v849 = vrot.slane %v846, 4
        %v850 = vrot.slane %v848, 4
        %v851 = vsel %vm514, %v846, %v849
        %v852 = vsel %vm514, %v848, %v850
        %855 = vst [vmem:[#allocation4 + $0x20] sm:$0xf] %v851
        %856 = vst [vmem:[#allocation4 + $0x28] sm:$0xf] %v852
        %v857 = vld [vmem:[#allocation3] sm:$0xff]
        %v858 = vld [vmem:[#allocation3 + $0x8] sm:$0xff]
        %861 = vrot.lane.b32.xlu0 %v857, 119
        %v862 = vpop.permute.xlu0 %861
        %863 = vrot.lane.b32.xlu0 %v858, 119
        %v864 = vpop.permute.xlu0 %863
        %v865 = vrot.slane %v862, 4
        %v866 = vrot.slane %v864, 4
        %vm867 = vcmask 973824
        %v868 = vsel %vm867, %v862, %v865
        %v869 = vsel %vm867, %v864, %v866
        %872 = vst [vmem:[#allocation4 + $0x30] sm:$0xf] %v868
        %873 = vst [vmem:[#allocation4 + $0x38] sm:$0xf] %v869
        %v874 = vld [vmem:[#allocation3] sm:$0xff]
        %v875 = vld [vmem:[#allocation3 + $0x8] sm:$0xff]
        %878 = vrot.lane.b32.xlu0 %v874, 116
        %v879 = vpop.permute.xlu0 %878
        %880 = vrot.lane.b32.xlu0 %v875, 116
        %v881 = vpop.permute.xlu0 %880
        %v882 = vrot.slane %v879, 4
        %v883 = vrot.slane %v881, 4
        %vm884 = vcmask 949248
        %v885 = vsel %vm884, %v879, %v882
        %v886 = vsel %vm884, %v881, %v883
        %889 = vst [vmem:[#allocation4 + $0x40] sm:$0xf] %v885
        %890 = vst [vmem:[#allocation4 + $0x48] sm:$0xf] %v886
        %v891 = vld [vmem:[#allocation3] sm:$0xff]
        %v892 = vld [vmem:[#allocation3 + $0x8] sm:$0xff]
        %895 = vrot.lane.b32.xlu0 %v891, 113
        %v896 = vpop.permute.xlu0 %895
        %897 = vrot.lane.b32.xlu0 %v892, 113
        %v898 = vpop.permute.xlu0 %897
        %v899 = vrot.slane %v896, 4
        %v900 = vrot.slane %v898, 4
        %vm901 = vcmask 924672
        %v902 = vsel %vm901, %v896, %v899
        %v903 = vsel %vm901, %v898, %v900
        %906 = vst [vmem:[#allocation4 + $0x50] sm:$0xf] %v902
        %907 = vst [vmem:[#allocation4 + $0x58] sm:$0xf] %v903
        %v908 = vld [vmem:[#allocation3] sm:$0xff]
        %v909 = vld [vmem:[#allocation3 + $0x8] sm:$0xff]
        %912 = vrot.lane.b32.xlu0 %v908, 110
        %v913 = vpop.permute.xlu0 %912
        %914 = vrot.lane.b32.xlu0 %v909, 110
        %v915 = vpop.permute.xlu0 %914
        %v916 = vrot.slane %v913, 4
        %v917 = vrot.slane %v915, 4
        %vm918 = vcmask 900096
        %v919 = vsel %vm918, %v913, %v916
        %v920 = vsel %vm918, %v915, %v917
        %923 = vst [vmem:[#allocation4 + $0x60] sm:$0xf] %v919
        %924 = vst [vmem:[#allocation4 + $0x68] sm:$0xf] %v920
        %s925 = scalar_lea.vmem %s2, 8
        %v926 = vld [vmem:[%s925] sm:$0xf]
        %v927 = vld [vmem:[%s925 + $0x4] sm:$0xf]
        %v928 = vld [vmem:[#allocation4] sm:$0xf]
        %v929 = vld [vmem:[#allocation4 + $0x8] sm:$0xf]
        %v930 = vld [vmem:[#allocation4 + $0x10] sm:$0xf]
        %v931 = vld [vmem:[#allocation4 + $0x18] sm:$0xf]
        %v932 = vld [vmem:[#allocation4 + $0x20] sm:$0xf]
        %v933 = vld [vmem:[#allocation4 + $0x28] sm:$0xf]
        %v934 = vld [vmem:[#allocation4 + $0x30] sm:$0xf]
        %v935 = vld [vmem:[#allocation4 + $0x38] sm:$0xf]
        %v936 = vld [vmem:[#allocation4 + $0x40] sm:$0xf]
        %v937 = vld [vmem:[#allocation4 + $0x48] sm:$0xf]
        %v938 = vld [vmem:[#allocation4 + $0x50] sm:$0xf]
        %v939 = vld [vmem:[#allocation4 + $0x58] sm:$0xf]
        %v940 = vld [vmem:[#allocation4 + $0x60] sm:$0xf]
        %v941 = vld [vmem:[#allocation4 + $0x68] sm:$0xf]
        %s942 = scalar_lea.vmem %s3, 16
        %v943 = vld [vmem:[%s942] sm:$0xff]
        %v944 = vld [vmem:[%s942 + $0x8] sm:$0xff]
        %946 = vset.pattern.permute.xlu0 0
        %947 = vperm.xlu0 %946, %v943
        %v948 = vpop.permute.xlu0 %947
        %951 = vset.pattern.permute.xlu0 0
        %952 = vperm.xlu0 %951, %v944
        %v953 = vpop.permute.xlu0 %952
        %v957 = vunpack.c.l.b16 %v926
        %v958 = vunpack.c.l.b16 %v927
        %v959 = vpack.c.b16 %v958, %v957
        %v974 = vunpack.c.l.b16 %v928
        %v975 = vunpack.c.l.b16 %v929
        %v976 = vunpack.c.l.b16 %v930
        %v977 = vunpack.c.l.b16 %v931
        %v978 = vunpack.c.l.b16 %v932
        %v979 = vunpack.c.l.b16 %v933
        %v980 = vunpack.c.l.b16 %v934
        %v981 = vunpack.c.l.b16 %v935
        %v982 = vunpack.c.l.b16 %v936
        %v983 = vunpack.c.l.b16 %v937
        %v984 = vunpack.c.l.b16 %v938
        %v985 = vunpack.c.l.b16 %v939
        %v986 = vunpack.c.l.b16 %v940
        %v987 = vunpack.c.l.b16 %v941
        %v988 = vpack.c.b16 %v975, %v974
        %v989 = vpack.c.b16 %v977, %v976
        %v990 = vpack.c.b16 %v979, %v978
        %v991 = vpack.c.b16 %v981, %v980
        %v992 = vpack.c.b16 %v983, %v982
        %v993 = vpack.c.b16 %v985, %v984
        %v994 = vpack.c.b16 %v987, %v986
        %v1003 = vsel %vm624, %v959, 0
        %1005 = vmatpush.bf16.msra.mxu0 0
        %1006 = vmatpush.bf16.msra.mxu0 %v994
        %1007 = vmatpush.bf16.msra.mxu0 %v993
        %1008 = vmatpush.bf16.msra.mxu0 %v992
        %1009 = vmatpush.bf16.msra.mxu0 %v991
        %1010 = vmatpush.bf16.msra.mxu0 %v990
        %1011 = vmatpush.bf16.msra.mxu0 %v989
        %1012 = vmatpush.bf16.msra.mxu0 %v988
        %1013 = vmatmul.bf16.gmra.mxu0 %v1003
        %v1014 = vpop.f32.mrf.mxu0
        %v1015 = vadd.f32 %v948, %v1014
        %v1016 = vpop.f32.mrf.mxu0
        %v1017 = vadd.f32 %v953, %v1016
        %1018 = vdwg.mxu0
        %vm1019 = vcmp.gt.f32.partialorder %v1015, 0.0
        %vm1020 = vcmp.gt.f32.partialorder %v1017, 0.0
        %v1021 = vmul.f32 %v1015, 0.01
        %v1022 = vmul.f32 %v1017, 0.01
        %v1023 = vsel %vm1019, %v1015, %v1021
        %v1024 = vsel %vm1020, %v1017, %v1022
        %s1025 = scalar_lea.vmem %s4, 8
        %v1026 = vld [vmem:[%s1025] sm:$0xf]
        %v1027 = vld [vmem:[%s1025 + $0x4] sm:$0xf]
        %v1028 = vpack.c.bf16 %v1024, %v1023
        %s1029 = scalar_lea.vmem %s5, 16
        %v1030 = vld [vmem:[%s1029] sm:$0xff]
        %v1031 = vld [vmem:[%s1029 + $0x8] sm:$0xff]
        %1033 = vset.pattern.permute.xlu0 0
        %1034 = vperm.xlu0 %1033, %v1030
        %v1035 = vpop.permute.xlu0 %1034
        %1038 = vset.pattern.permute.xlu0 0
        %1039 = vperm.xlu0 %1038, %v1031
        %v1040 = vpop.permute.xlu0 %1039
        %v1044 = vunpack.c.l.b16 %v1026
        %v1045 = vunpack.c.l.b16 %v1027
        %v1046 = vpack.c.b16 %v1045, %v1044
        %v1048 = vsel %vm689, %v1046, 0
        %1050 = vmatpush.bf16.msra.mxu0 0
        %1051 = vmatpush.bf16.msra.mxu0 0
        %1052 = vmatpush.bf16.msra.mxu0 0
        %1053 = vmatpush.bf16.msra.mxu0 0
        %1054 = vmatpush.bf16.msra.mxu0 0
        %1055 = vmatpush.bf16.msra.mxu0 0
        %1056 = vmatpush.bf16.msra.mxu0 0
        %1057 = vmatpush.bf16.msra.mxu0 %v1028
        %1058 = vmatmul.bf16.gmra.mxu0 %v1048
        %v1059 = vpop.f32.mrf.mxu0
        %v1060 = vadd.f32 %v1035, %v1059
        %v1061 = vpop.f32.mrf.mxu0
        %v1062 = vadd.f32 %v1040, %v1061
        %1063 = vdwg.mxu0
        %v1064 = vadd.f32 %v769, %v1060
        %v1065 = vadd.f32 %v772, %v1062
        %1066 = vst [vmem:[#allocation2 + $0x8] sm:$0xff] %v1064
        %1067 = vst [vmem:[#allocation2 + $0x20] sm:$0xff] %v1065
        %v1068 = vld [vmem:[#allocation2 + $0x8] sm:$0xff]
        %v1069 = vld [vmem:[#allocation2 + $0x20] sm:$0xff]
        %1070 = vst [vmem:[%s334] sm:$0xff] %v1068
        %1071 = vst [vmem:[%s334 + $0x8] sm:$0xff] %v1069
        %s1072 = sand.u32 %s188, 1
        %s1073 = scalar_lea.sflag [#allocation7], %s1072
        %s1074 = sand.u32 %s188, 1
        %s1075 = smul.addr %s1074, 16
        %s1076 = scalar_lea.vmem [#allocation10], %s1075
        // Predicated region
        $region61: #{tpu_custom_call.1} parent=43 // pred_check
          %p1077 = pneg %p198
        $region62: #{tpu_custom_call.1} parent=43 // pred_check_branch
          %1079 = sbr.rel (%p1077) target = $region64
        $region63: #{tpu_custom_call.1} parent=43 // pred_region
          %1081 = vsyncadd %s1073, 0
          %s1082 = smul.addr %s31, 8
          %s1083 = sadd.s32 %s30, %s1082
          %s1084 = smul.addr %s1083, 8
          %s1085 = scalar_lea.hbm %s6, %s1084
          %s1086 = sshll.u32 %s1076, 4
          %s1087 = int_to_ptr.vmem [resolvable:$true] %s1086
          %s1088 = sshll.u32 %s1085, 4
          %s1089 = int_to_ptr.hbm [resolvable:$true] %s1088
          %1094 = dma.vmem_to_hbm [thread:$0]  %s1087, 256, %s1089, %s1073, 128, 512, 8
        $region64: #{tpu_custom_call.1} parent=43 // pred_fallthru
          _
      $region44: #{tpu_custom_call.1} parent=5 // pred_fallthru
        _
      %p1095 = scmp.le.s32.totalorder 2, %s21
      // Predicated region
      $region65: #{tpu_custom_call.1} parent=5 // pred_check
        %p1096 = pneg %p1095
      $region66: #{tpu_custom_call.1} parent=5 // pred_check_branch
        %1098 = sbr.rel (%p1096) target = $region68
      $region67: #{tpu_custom_call.1} parent=5 // pred_region
        %s1099 = ssub.s32 %s21, 2
        // Predicated region
        $region69: #{tpu_custom_call.1} parent=67 // pred_check
          %p1100 = pneg %p204
        $region70: #{tpu_custom_call.1} parent=67 // pred_check_branch
          %1102 = sbr.rel (%p1100) target = $region72
        $region71: #{tpu_custom_call.1} parent=67 // pred_region
          %s1103 = sand.u32 %s189, 1
          %s1104 = scalar_lea.sflag [#allocation7], %s1103
          %s1105 = sand.u32 %s189, 1
          %s1106 = smul.addr %s1105, 16
          %s1107 = scalar_lea.vmem [#allocation10], %s1106
          %1109 = dma.done %s1104, 256
        $region72: #{tpu_custom_call.1} parent=67 // pred_fallthru
          _
      $region68: #{tpu_custom_call.1} parent=5 // pred_fallthru
        _
    $region6: #{tpu_custom_call.1} parent=1 // loop_footer
      %s25 = sadd.s32 1, %s21
    $region7: #{tpu_custom_call.1} parent=1 // loop_footer_branch
      %20 = sbr.rel target = $region3
    $region8: #{tpu_custom_call.1} parent=1 // loop_exit
      _
    %1110 = vsyncpa [#allocation6], 1
    %s1111 = scalar_lea.sflag [#allocation6], 1
    %1112 = vsyncpa %s1111, 1
    %1113 = vsyncpa [#allocation9], 1
    %s1114 = scalar_lea.sflag [#allocation9], 1
    %1115 = vsyncpa %s1114, 1
    %1116 = vsyncpa [#allocation7], 1
    %s1117 = scalar_lea.sflag [#allocation7], 1
    %1118 = vsyncpa %s1117, 1

</llo_original>
